<compile_context>
chip_gen: v7x
topology: tpu7x:2x2x1
jax: 0.10.0
libtpu: 0.0.40
codegen_flags: <defaults>
</compile_context>

<pallas_src>
import jax
import jax.numpy as jnp
from jax.experimental import pallas as pl
from jax.experimental.pallas import tpu as pltpu

INPUT_SIZE = 768
H1 = INPUT_SIZE // 2   # 384
H2 = INPUT_SIZE // 4   # 192

MAX_BATCH_TILE = 256   # rows per grid step (multiple of 8 f32 sublanes)


def _cdiv(a, b):
    return -(-a // b)


def _round_up(a, b):
    return _cdiv(a, b) * b


def mlp_kernel(x_ref, w1_ref, b1_ref, w2_ref, b2_ref, w3_ref, b3_ref, o_ref):
    # Layer 1: (TB, 768)bf16 @ (768, 384)bf16 -> f32 acc, +bias, ReLU
    h1 = jnp.dot(x_ref[...], w1_ref[...], preferred_element_type=jnp.float32)
    h1 = jnp.maximum(h1 + b1_ref[...], 0.0)
    # Layer 2: (TB, 384) @ (384, 192) -> f32 acc, +bias, ReLU
    h2 = jnp.dot(h1.astype(jnp.bfloat16), w2_ref[...],
                 preferred_element_type=jnp.float32)
    h2 = jnp.maximum(h2 + b2_ref[...], 0.0)
    # Layer 3: (TB, 192) @ (192, 768) -> f32 acc, +bias (logits, no activation)
    out = jnp.dot(h2.astype(jnp.bfloat16), w3_ref[...],
                  preferred_element_type=jnp.float32)
    o_ref[...] = (out + b3_ref[...]).astype(o_ref.dtype)


def _pick_batch_tile(b_pad):
    """Choose a batch tile: <=256 rows, multiple of 8, >=2 grid steps when
    the batch is big enough to usefully split across v7x's two TensorCores."""
    if b_pad > MAX_BATCH_TILE:
        return MAX_BATCH_TILE
    if b_pad >= 128:
        return _round_up(_cdiv(b_pad, 2), 8)
    return b_pad


def neural_network_forward(x_nchw, params):
    """Forward pass matching NeuralNetwork.forward (flatten + 3-layer MLP)."""
    w1, b1, w2, b2, w3, b3 = params
    B = x_nchw.shape[0]
    x = x_nchw.reshape(B, -1).astype(jnp.float32)   # nn.Flatten -> (B, 768)
    assert x.shape[1] == INPUT_SIZE

    # --- batch tiling: pad rows so the tile divides the (padded) batch -----
    b_pad = _round_up(B, 8)
    tb = _pick_batch_tile(b_pad)
    num_tiles = _cdiv(b_pad, tb)
    b_total = num_tiles * tb
    if b_total != B:
        x = jnp.pad(x, ((0, b_total - B), (0, 0)))

    # --- dtypes: bf16 streaming, f32 accumulate / bias / output ------------
    x = x.astype(jnp.bfloat16)
    w1 = w1.astype(jnp.bfloat16)
    w2 = w2.astype(jnp.bfloat16)
    w3 = w3.astype(jnp.bfloat16)
    b1 = b1.astype(jnp.float32)
    b2 = b2.astype(jnp.float32)
    b3 = b3.astype(jnp.float32)

    # Weights/biases: full blocks with constant index maps -> VMEM-resident
    # across all grid steps.
    const = lambda shape: pl.BlockSpec(shape, lambda i: (0, 0))

    # --- explicit VMEM budget & cost hint -----------------------------------
    w_bytes = 2 * (INPUT_SIZE * H1 + H1 * H2 + H2 * INPUT_SIZE)       # bf16
    b_bytes = 4 * (H1 + H2 + INPUT_SIZE)                              # f32
    x_tile_bytes = tb * INPUT_SIZE * 2                                # bf16
    o_tile_bytes = tb * INPUT_SIZE * 4                                # f32
    inter_bytes = tb * (H1 + H2 + INPUT_SIZE) * 4                     # f32
    vmem_limit = int(2 * (w_bytes + b_bytes)             # double-buffered consts
                     + 2 * (x_tile_bytes + o_tile_bytes)  # double-buffered tiles
                     + inter_bytes
                     + (4 << 20))                         # headroom
    vmem_limit = min(vmem_limit, 64 << 20)

    flops = 2 * b_total * (INPUT_SIZE * H1 + H1 * H2 + H2 * INPUT_SIZE)
    bytes_accessed = (w_bytes + b_bytes
                      + b_total * INPUT_SIZE * 2          # x  (bf16)
                      + b_total * INPUT_SIZE * 4)         # out (f32)
    cost = pl.CostEstimate(flops=flops, transcendentals=0,
                           bytes_accessed=bytes_accessed)

    out = pl.pallas_call(
        mlp_kernel,
        out_shape=jax.ShapeDtypeStruct((b_total, INPUT_SIZE), jnp.float32),
        grid_spec=pltpu.PrefetchScalarGridSpec(
            num_scalar_prefetch=0,
            grid=(num_tiles,),
            in_specs=[
                pl.BlockSpec((tb, INPUT_SIZE), lambda i: (i, 0)),   # x tile
                const((INPUT_SIZE, H1)), const((1, H1)),            # layer 1
                const((H1, H2)), const((1, H2)),                    # layer 2
                const((H2, INPUT_SIZE)), const((1, INPUT_SIZE)),    # layer 3
            ],
            out_specs=pl.BlockSpec((tb, INPUT_SIZE), lambda i: (i, 0)),
        ),
        compiler_params=pltpu.CompilerParams(
            dimension_semantics=("parallel",),
            vmem_limit_bytes=vmem_limit,
        ),
        cost_estimate=cost,
    )(x, w1, b1, w2, b2, w3, b3)

    return out[:B]


def init_params(key):
    """Deterministic init matching PyTorch Linear default (U(-1/sqrt(in), 1/sqrt(in)))."""
    dims = [(INPUT_SIZE, H1), (H1, H2), (H2, INPUT_SIZE)]
    params = []
    for (fan_in, fan_out) in dims:
        key, kw, kb = jax.random.split(key, 3)
        bound = 1.0 / jnp.sqrt(fan_in)
        # stored as (in, out): equivalent to PyTorch W (out, in) transposed
        w = jax.random.uniform(kw, (fan_in, fan_out), jnp.float32, -bound, bound)
        b = jax.random.uniform(kb, (1, fan_out), jnp.float32, -bound, bound)
        params += [w, b]
    return tuple(params)


if __name__ == "__main__":
    key = jax.random.PRNGKey(0)
    kx, kp = jax.random.split(key)

    # (B, C, H, W) with C*H*W == 768
    x = jax.random.normal(kx, (2, 3, 16, 16), dtype=jnp.float32)
    params = init_params(kp)

    out = neural_network_forward(x, params)
    out = jax.block_until_ready(out)
    assert out.shape == (2, INPUT_SIZE)

    # correctness check vs a pure-JAX reference using the same bf16-weight /
    # f32-accumulate math as the kernel
    w1, b1, w2, b2, w3, b3 = params
    xb = x.reshape(x.shape[0], -1).astype(jnp.bfloat16)
    w1b, w2b, w3b = (w.astype(jnp.bfloat16) for w in (w1, w2, w3))
    h1 = jnp.maximum(
        jnp.dot(xb, w1b, preferred_element_type=jnp.float32) + b1, 0.0)
    h2 = jnp.maximum(
        jnp.dot(h1.astype(jnp.bfloat16), w2b,
                preferred_element_type=jnp.float32) + b2, 0.0)
    ref = jnp.dot(h2.astype(jnp.bfloat16), w3b,
                  preferred_element_type=jnp.float32) + b3
    max_err = float(jnp.max(jnp.abs(out - ref)))
    assert jnp.allclose(out, ref, atol=1e-2, rtol=1e-2), max_err

    print("KERNEL_OK")
</pallas_src>

<mosaic_0001>
module attributes {stable_mosaic.version = 11 : i64} {
  func.func @mlp_kernel(%arg0: i32, %arg1: memref<8x768xbf16, #tpu.memory_space<vmem>>, %arg2: memref<768x384xbf16, #tpu.memory_space<vmem>>, %arg3: memref<1x384xf32, #tpu.memory_space<vmem>>, %arg4: memref<384x192xbf16, #tpu.memory_space<vmem>>, %arg5: memref<1x192xf32, #tpu.memory_space<vmem>>, %arg6: memref<192x768xbf16, #tpu.memory_space<vmem>>, %arg7: memref<1x768xf32, #tpu.memory_space<vmem>>, %arg8: memref<8x768xf32, #tpu.memory_space<vmem>>) attributes {dimension_semantics = [#tpu.dimension_semantics<parallel>], iteration_bounds = array<i64: 1>, scalar_prefetch = 0 : i64, scratch_operands = 0 : i64, tpu.core_type = #tpu.core_type<tc>, window_params = [{transform_indices = @transform_0, window_bounds = array<i64: 8, 768>}, {pipeline_mode = #tpu.pipeline_mode<synchronous>, transform_indices = @transform_1, window_bounds = array<i64: 768, 384>}, {pipeline_mode = #tpu.pipeline_mode<synchronous>, transform_indices = @transform_2, window_bounds = array<i64: 1, 384>}, {pipeline_mode = #tpu.pipeline_mode<synchronous>, transform_indices = @transform_3, window_bounds = array<i64: 384, 192>}, {pipeline_mode = #tpu.pipeline_mode<synchronous>, transform_indices = @transform_4, window_bounds = array<i64: 1, 192>}, {pipeline_mode = #tpu.pipeline_mode<synchronous>, transform_indices = @transform_5, window_bounds = array<i64: 192, 768>}, {pipeline_mode = #tpu.pipeline_mode<synchronous>, transform_indices = @transform_6, window_bounds = array<i64: 1, 768>}, {transform_indices = @transform_7, window_bounds = array<i64: 8, 768>}]} {
    %c0 = arith.constant 0 : index
    %c0_0 = arith.constant 0 : index
    %0 = vector.load %arg1[%c0, %c0_0] : memref<8x768xbf16, #tpu.memory_space<vmem>>, vector<8x768xbf16>
    %c0_1 = arith.constant 0 : index
    %c0_2 = arith.constant 0 : index
    %1 = vector.load %arg2[%c0_1, %c0_2] : memref<768x384xbf16, #tpu.memory_space<vmem>>, vector<768x384xbf16>
    %cst = arith.constant dense<0.000000e+00> : vector<8x384xf32>
    %2 = tpu.matmul %0, %1, %cst {dimension_numbers = #tpu.dot_dimension_numbers<[1], [0], [0], [1], [0, 0, 1, 1], [], []>} : vector<8x768xbf16>, vector<768x384xbf16>, vector<8x384xf32> -> vector<8x384xf32>
    %c0_3 = arith.constant 0 : index
    %c0_4 = arith.constant 0 : index
    %3 = vector.load %arg3[%c0_3, %c0_4] : memref<1x384xf32, #tpu.memory_space<vmem>>, vector<1x384xf32>
    %4 = vector.broadcast %3 : vector<1x384xf32> to vector<8x384xf32>
    %5 = arith.addf %2, %4 : vector<8x384xf32>
    %cst_5 = arith.constant 0.000000e+00 : f32
    %6 = vector.broadcast %cst_5 : f32 to vector<8x384xf32>
    %7 = arith.maximumf %5, %6 : vector<8x384xf32>
    %8 = arith.truncf %7 : vector<8x384xf32> to vector<8x384xbf16>
    %c0_6 = arith.constant 0 : index
    %c0_7 = arith.constant 0 : index
    %9 = vector.load %arg4[%c0_6, %c0_7] : memref<384x192xbf16, #tpu.memory_space<vmem>>, vector<384x192xbf16>
    %cst_8 = arith.constant dense<0.000000e+00> : vector<8x192xf32>
    %10 = tpu.matmul %8, %9, %cst_8 {dimension_numbers = #tpu.dot_dimension_numbers<[1], [0], [0], [1], [0, 0, 1, 1], [], []>} : vector<8x384xbf16>, vector<384x192xbf16>, vector<8x192xf32> -> vector<8x192xf32>
    %c0_9 = arith.constant 0 : index
    %c0_10 = arith.constant 0 : index
    %11 = vector.load %arg5[%c0_9, %c0_10] : memref<1x192xf32, #tpu.memory_space<vmem>>, vector<1x192xf32>
    %12 = vector.broadcast %11 : vector<1x192xf32> to vector<8x192xf32>
    %13 = arith.addf %10, %12 : vector<8x192xf32>
    %cst_11 = arith.constant 0.000000e+00 : f32
    %14 = vector.broadcast %cst_11 : f32 to vector<8x192xf32>
    %15 = arith.maximumf %13, %14 : vector<8x192xf32>
    %16 = arith.truncf %15 : vector<8x192xf32> to vector<8x192xbf16>
    %c0_12 = arith.constant 0 : index
    %c0_13 = arith.constant 0 : index
    %17 = vector.load %arg6[%c0_12, %c0_13] : memref<192x768xbf16, #tpu.memory_space<vmem>>, vector<192x768xbf16>
    %cst_14 = arith.constant dense<0.000000e+00> : vector<8x768xf32>
    %18 = tpu.matmul %16, %17, %cst_14 {dimension_numbers = #tpu.dot_dimension_numbers<[1], [0], [0], [1], [0, 0, 1, 1], [], []>} : vector<8x192xbf16>, vector<192x768xbf16>, vector<8x768xf32> -> vector<8x768xf32>
    %c0_15 = arith.constant 0 : index
    %c0_16 = arith.constant 0 : index
    %19 = vector.load %arg7[%c0_15, %c0_16] : memref<1x768xf32, #tpu.memory_space<vmem>>, vector<1x768xf32>
    %20 = vector.broadcast %19 : vector<1x768xf32> to vector<8x768xf32>
    %21 = arith.addf %18, %20 : vector<8x768xf32>
    %c0_17 = arith.constant 0 : index
    %c0_18 = arith.constant 0 : index
    %22 = vector.load %arg8[%c0_17, %c0_18] : memref<8x768xf32, #tpu.memory_space<vmem>>, vector<8x768xf32>
    tpu.vector_store %arg8[%c0_17, %c0_18], %21 {strides = array<i32>} : memref<8x768xf32, #tpu.memory_space<vmem>>, vector<8x768xf32>,
    return
  }
  func.func @transform_0(%arg0: i32) -> (i32, i32) {
    %c0_i32 = arith.constant 0 : i32
    %c0_i32_0 = arith.constant 0 : i32
    return %arg0, %c0_i32 : i32, i32
  }
  func.func @transform_1(%arg0: i32) -> (i32, i32) {
    %c0_i32 = arith.constant 0 : i32
    %c0_i32_0 = arith.constant 0 : i32
    %c0_i32_1 = arith.constant 0 : i32
    return %c0_i32, %c0_i32_0 : i32, i32
  }
  func.func @transform_2(%arg0: i32) -> (i32, i32) {
    %c0_i32 = arith.constant 0 : i32
    %c0_i32_0 = arith.constant 0 : i32
    %c0_i32_1 = arith.constant 0 : i32
    return %c0_i32, %c0_i32_0 : i32, i32
  }
  func.func @transform_3(%arg0: i32) -> (i32, i32) {
    %c0_i32 = arith.constant 0 : i32
    %c0_i32_0 = arith.constant 0 : i32
    %c0_i32_1 = arith.constant 0 : i32
    return %c0_i32, %c0_i32_0 : i32, i32
  }
  func.func @transform_4(%arg0: i32) -> (i32, i32) {
    %c0_i32 = arith.constant 0 : i32
    %c0_i32_0 = arith.constant 0 : i32
    %c0_i32_1 = arith.constant 0 : i32
    return %c0_i32, %c0_i32_0 : i32, i32
  }
  func.func @transform_5(%arg0: i32) -> (i32, i32) {
    %c0_i32 = arith.constant 0 : i32
    %c0_i32_0 = arith.constant 0 : i32
    %c0_i32_1 = arith.constant 0 : i32
    return %c0_i32, %c0_i32_0 : i32, i32
  }
  func.func @transform_6(%arg0: i32) -> (i32, i32) {
    %c0_i32 = arith.constant 0 : i32
    %c0_i32_0 = arith.constant 0 : i32
    %c0_i32_1 = arith.constant 0 : i32
    return %c0_i32, %c0_i32_0 : i32, i32
  }
  func.func @transform_7(%arg0: i32) -> (i32, i32) {
    %c0_i32 = arith.constant 0 : i32
    %c0_i32_0 = arith.constant 0 : i32
    return %arg0, %c0_i32 : i32, i32
  }
}

</mosaic_0001>

<llo_original>
// kernel: tpu_custom_call.1
$region0: #{tpu_custom_call.1}
  #allocation0 [shape = 'u32[]', space=smem, size = 0x4, offset = 0x4, fixed_abs, tag = 'smem constant byte address 0x4 - core index']
  #allocation1 [shape = 'u32[144,128]{1,0:T(1,128)}', space=vmem, size = 0x12000, scoped, tag = 'internal scratch']
  %s0 = inlined_call_operand.vmem [shape: bf16[8,768], index: 0, kind: input, shape index: {}]
  %s1 = inlined_call_operand.hbm [shape: bf16[768,384], index: 1, kind: input, shape index: {}]
  %s2 = inlined_call_operand.vmem [shape: f32[1,384], index: 2, kind: input, shape index: {}]
  %s3 = inlined_call_operand.vmem [shape: bf16[384,192], index: 3, kind: input, shape index: {}]
  %s4 = inlined_call_operand.vmem [shape: f32[1,192], index: 4, kind: input, shape index: {}]
  %s5 = inlined_call_operand.vmem [shape: bf16[192,768], index: 5, kind: input, shape index: {}]
  %s6 = inlined_call_operand.vmem [shape: f32[1,768], index: 6, kind: input, shape index: {}]
  %s7 = inlined_call_operand.hbm [shape: f32[8,768], index: 7, kind: output, shape index: {}]
  %s8 = sld [smem:[#allocation0]]
  $region42: #{tpu_custom_call.1} parent=0
    _
  %s10 = ssub.s32 1, %s8
  %s11 = scalar_select 0, %s10, %s8
  $region1: #{tpu_custom_call.1} parent=0
    #allocation2 [shape = 'u8[589824]{0}', space=vmem, size = 0x90000, scoped, tag = 'input window, operand 1, single buffered']
    #allocation3 [shape = 's32[1]{0}', space=sflag, size = 0x4, scoped, tag = 'scoped memory for tpu_custom_call.1']
    #allocation4 [shape = 's32[1]{0}', space=sflag, size = 0x4, scoped, tag = 'scoped memory for tpu_custom_call.1']
    #allocation5 [shape = 'u8[24576]{0}', space=vmem, size = 0x6000, scoped, tag = 'output window, operand 0, single buffered']
    %12 = vsyncpa [#allocation3], 0
    %13 = vsyncpa [#allocation4], 0
    // Predicated region
    $region2: #{tpu_custom_call.1} parent=1 // pred_check
      _
    $region3: #{tpu_custom_call.1} parent=1 // pred_check_branch
      %15 = sbr.rel (0) target = $region5
    $region4: #{tpu_custom_call.1} parent=1 // pred_region
      _
    $region5: #{tpu_custom_call.1} parent=1 // pred_fallthru
      _
    // Predicated region
    $region6: #{tpu_custom_call.1} parent=1 // pred_check
      _
    $region7: #{tpu_custom_call.1} parent=1 // pred_check_branch
      %17 = sbr.rel (0) target = $region9
    $region8: #{tpu_custom_call.1} parent=1 // pred_region
      %s19 = ssub.s32 18432, 18432
      %20 = vsyncadd [#allocation3], %s19
      %s21 = sshll.u32 [#allocation2], 4
      %s22 = int_to_ptr.vmem [resolvable:$true] %s21
      %27 = dma.hbm_to_vmem [thread:$0]  %s1, 18432, %s22, [#allocation3], 192, 192, 12
    $region9: #{tpu_custom_call.1} parent=1 // pred_fallthru
      _
    // Predicated region
    $region10: #{tpu_custom_call.1} parent=1 // pred_check
      _
    $region11: #{tpu_custom_call.1} parent=1 // pred_check_branch
      %29 = sbr.rel (0) target = $region13
    $region12: #{tpu_custom_call.1} parent=1 // pred_region
      _
    $region13: #{tpu_custom_call.1} parent=1 // pred_fallthru
      _
    // Predicated region
    $region14: #{tpu_custom_call.1} parent=1 // pred_check
      _
    $region15: #{tpu_custom_call.1} parent=1 // pred_check_branch
      %31 = sbr.rel (0) target = $region17
    $region16: #{tpu_custom_call.1} parent=1 // pred_region
      _
    $region17: #{tpu_custom_call.1} parent=1 // pred_fallthru
      _
    // Predicated region
    $region18: #{tpu_custom_call.1} parent=1 // pred_check
      _
    $region19: #{tpu_custom_call.1} parent=1 // pred_check_branch
      %33 = sbr.rel (0) target = $region21
    $region20: #{tpu_custom_call.1} parent=1 // pred_region
      _
    $region21: #{tpu_custom_call.1} parent=1 // pred_fallthru
      _
    // Predicated region
    $region22: #{tpu_custom_call.1} parent=1 // pred_check
      _
    $region23: #{tpu_custom_call.1} parent=1 // pred_check_branch
      %35 = sbr.rel (0) target = $region25
    $region24: #{tpu_custom_call.1} parent=1 // pred_region
      _
    $region25: #{tpu_custom_call.1} parent=1 // pred_fallthru
      _
    // Predicated region
    $region26: #{tpu_custom_call.1} parent=1 // pred_check
      _
    $region27: #{tpu_custom_call.1} parent=1 // pred_check_branch
      %37 = sbr.rel (0) target = $region29
    $region28: #{tpu_custom_call.1} parent=1 // pred_region
      _
    $region29: #{tpu_custom_call.1} parent=1 // pred_fallthru
      _
    // Predicated region
    $region30: #{tpu_custom_call.1} parent=1 // pred_check
      _
    $region31: #{tpu_custom_call.1} parent=1 // pred_check_branch
      %39 = sbr.rel (0) target = $region33
    $region32: #{tpu_custom_call.1} parent=1 // pred_region
      %40 = dma.done [#allocation3], 18432
    $region33: #{tpu_custom_call.1} parent=1 // pred_fallthru
      _
    %v42 = vld [vmem:[%s0] sm:$0xff]
    %v43 = vld [vmem:[%s0 + $0x8] sm:$0xff]
    %v44 = vld [vmem:[%s0 + $0x10] sm:$0xff]
    %v45 = vld [vmem:[#allocation2] sm:$0xff]
    %v46 = vld [vmem:[#allocation2 + $0x8] sm:$0xf]
    %v47 = vld [vmem:[#allocation2 + $0xc] sm:$0xff]
    %v48 = vld [vmem:[#allocation2 + $0x14] sm:$0xf]
    %v49 = vld [vmem:[#allocation2 + $0x18] sm:$0xff]
    %v50 = vld [vmem:[#allocation2 + $0x20] sm:$0xf]
    %v51 = vld [vmem:[#allocation2 + $0x24] sm:$0xff]
    %v52 = vld [vmem:[#allocation2 + $0x2c] sm:$0xf]
    %v53 = vld [vmem:[#allocation2 + $0x30] sm:$0xff]
    %v54 = vld [vmem:[#allocation2 + $0x38] sm:$0xf]
    %v55 = vld [vmem:[#allocation2 + $0x3c] sm:$0xff]
    %v56 = vld [vmem:[#allocation2 + $0x44] sm:$0xf]
    %v57 = vld [vmem:[#allocation2 + $0x48] sm:$0xff]
    %v58 = vld [vmem:[#allocation2 + $0x50] sm:$0xf]
    %v59 = vld [vmem:[#allocation2 + $0x54] sm:$0xff]
    %v60 = vld [vmem:[#allocation2 + $0x5c] sm:$0xf]
    %v61 = vld [vmem:[#allocation2 + $0x60] sm:$0xff]
    %v62 = vld [vmem:[#allocation2 + $0x68] sm:$0xf]
    %v63 = vld [vmem:[#allocation2 + $0x6c] sm:$0xff]
    %v64 = vld [vmem:[#allocation2 + $0x74] sm:$0xf]
    %v65 = vld [vmem:[#allocation2 + $0x78] sm:$0xff]
    %v66 = vld [vmem:[#allocation2 + $0x80] sm:$0xf]
    %v67 = vld [vmem:[#allocation2 + $0x84] sm:$0xff]
    %v68 = vld [vmem:[#allocation2 + $0x8c] sm:$0xf]
    %v69 = vld [vmem:[#allocation2 + $0x90] sm:$0xff]
    %v70 = vld [vmem:[#allocation2 + $0x98] sm:$0xf]
    %v71 = vld [vmem:[#allocation2 + $0x9c] sm:$0xff]
    %v72 = vld [vmem:[#allocation2 + $0xa4] sm:$0xf]
    %v73 = vld [vmem:[#allocation2 + $0xa8] sm:$0xff]
    %v74 = vld [vmem:[#allocation2 + $0xb0] sm:$0xf]
    %v75 = vld [vmem:[#allocation2 + $0xb4] sm:$0xff]
    %v76 = vld [vmem:[#allocation2 + $0xbc] sm:$0xf]
    %v77 = vld [vmem:[#allocation2 + $0xc0] sm:$0xff]
    %v78 = vld [vmem:[#allocation2 + $0xc8] sm:$0xf]
    %v79 = vld [vmem:[#allocation2 + $0xcc] sm:$0xff]
    %v80 = vld [vmem:[#allocation2 + $0xd4] sm:$0xf]
    %v81 = vld [vmem:[#allocation2 + $0xd8] sm:$0xff]
    %v82 = vld [vmem:[#allocation2 + $0xe0] sm:$0xf]
    %v83 = vld [vmem:[#allocation2 + $0xe4] sm:$0xff]
    %v84 = vld [vmem:[#allocation2 + $0xec] sm:$0xf]
    %v85 = vld [vmem:[#allocation2 + $0xf0] sm:$0xff]
    %v86 = vld [vmem:[#allocation2 + $0xf8] sm:$0xf]
    %v87 = vld [vmem:[#allocation2 + $0xfc] sm:$0xff]
    %v88 = vld [vmem:[#allocation2 + $0x104] sm:$0xf]
    %v89 = vld [vmem:[#allocation2 + $0x108] sm:$0xff]
    %v90 = vld [vmem:[#allocation2 + $0x110] sm:$0xf]
    %v91 = vld [vmem:[#allocation2 + $0x114] sm:$0xff]
    %v92 = vld [vmem:[#allocation2 + $0x11c] sm:$0xf]
    %v93 = vld [vmem:[#allocation2 + $0x120] sm:$0xff]
    %v94 = vld [vmem:[#allocation2 + $0x128] sm:$0xf]
    %v95 = vld [vmem:[#allocation2 + $0x12c] sm:$0xff]
    %v96 = vld [vmem:[#allocation2 + $0x134] sm:$0xf]
    %v97 = vld [vmem:[#allocation2 + $0x138] sm:$0xff]
    %v98 = vld [vmem:[#allocation2 + $0x140] sm:$0xf]
    %v99 = vld [vmem:[#allocation2 + $0x144] sm:$0xff]
    %v100 = vld [vmem:[#allocation2 + $0x14c] sm:$0xf]
    %v101 = vld [vmem:[#allocation2 + $0x150] sm:$0xff]
    %v102 = vld [vmem:[#allocation2 + $0x158] sm:$0xf]
    %v103 = vld [vmem:[#allocation2 + $0x15c] sm:$0xff]
    %v104 = vld [vmem:[#allocation2 + $0x164] sm:$0xf]
    %v105 = vld [vmem:[#allocation2 + $0x168] sm:$0xff]
    %v106 = vld [vmem:[#allocation2 + $0x170] sm:$0xf]
    %v107 = vld [vmem:[#allocation2 + $0x174] sm:$0xff]
    %v108 = vld [vmem:[#allocation2 + $0x17c] sm:$0xf]
    %v109 = vld [vmem:[#allocation2 + $0x180] sm:$0xff]
    %v110 = vld [vmem:[#allocation2 + $0x188] sm:$0xf]
    %v111 = vld [vmem:[#allocation2 + $0x18c] sm:$0xff]
    %v112 = vld [vmem:[#allocation2 + $0x194] sm:$0xf]
    %v113 = vld [vmem:[#allocation2 + $0x198] sm:$0xff]
    %v114 = vld [vmem:[#allocation2 + $0x1a0] sm:$0xf]
    %v115 = vld [vmem:[#allocation2 + $0x1a4] sm:$0xff]
    %v116 = vld [vmem:[#allocation2 + $0x1ac] sm:$0xf]
    %v117 = vld [vmem:[#allocation2 + $0x1b0] sm:$0xff]
    %v118 = vld [vmem:[#allocation2 + $0x1b8] sm:$0xf]
    %v119 = vld [vmem:[#allocation2 + $0x1bc] sm:$0xff]
    %v120 = vld [vmem:[#allocation2 + $0x1c4] sm:$0xf]
    %v121 = vld [vmem:[#allocation2 + $0x1c8] sm:$0xff]
    %v122 = vld [vmem:[#allocation2 + $0x1d0] sm:$0xf]
    %v123 = vld [vmem:[#allocation2 + $0x1d4] sm:$0xff]
    %v124 = vld [vmem:[#allocation2 + $0x1dc] sm:$0xf]
    %v125 = vld [vmem:[#allocation2 + $0x1e0] sm:$0xff]
    %v126 = vld [vmem:[#allocation2 + $0x1e8] sm:$0xf]
    %v127 = vld [vmem:[#allocation2 + $0x1ec] sm:$0xff]
    %v128 = vld [vmem:[#allocation2 + $0x1f4] sm:$0xf]
    %v129 = vld [vmem:[#allocation2 + $0x1f8] sm:$0xff]
    %v130 = vld [vmem:[#allocation2 + $0x200] sm:$0xf]
    %v131 = vld [vmem:[#allocation2 + $0x204] sm:$0xff]
    %v132 = vld [vmem:[#allocation2 + $0x20c] sm:$0xf]
    %v133 = vld [vmem:[#allocation2 + $0x210] sm:$0xff]
    %v134 = vld [vmem:[#allocation2 + $0x218] sm:$0xf]
    %v135 = vld [vmem:[#allocation2 + $0x21c] sm:$0xff]
    %v136 = vld [vmem:[#allocation2 + $0x224] sm:$0xf]
    %v137 = vld [vmem:[#allocation2 + $0x228] sm:$0xff]
    %v138 = vld [vmem:[#allocation2 + $0x230] sm:$0xf]
    %v139 = vld [vmem:[#allocation2 + $0x234] sm:$0xff]
    %v140 = vld [vmem:[#allocation2 + $0x23c] sm:$0xf]
    %v141 = vld [vmem:[#allocation2 + $0x240] sm:$0xff]
    %v142 = vld [vmem:[#allocation2 + $0x248] sm:$0xf]
    %v143 = vld [vmem:[#allocation2 + $0x24c] sm:$0xff]
    %v144 = vld [vmem:[#allocation2 + $0x254] sm:$0xf]
    %v145 = vld [vmem:[#allocation2 + $0x258] sm:$0xff]
    %v146 = vld [vmem:[#allocation2 + $0x260] sm:$0xf]
    %v147 = vld [vmem:[#allocation2 + $0x264] sm:$0xff]
    %v148 = vld [vmem:[#allocation2 + $0x26c] sm:$0xf]
    %v149 = vld [vmem:[#allocation2 + $0x270] sm:$0xff]
    %v150 = vld [vmem:[#allocation2 + $0x278] sm:$0xf]
    %v151 = vld [vmem:[#allocation2 + $0x27c] sm:$0xff]
    %v152 = vld [vmem:[#allocation2 + $0x284] sm:$0xf]
    %v153 = vld [vmem:[#allocation2 + $0x288] sm:$0xff]
    %v154 = vld [vmem:[#allocation2 + $0x290] sm:$0xf]
    %v155 = vld [vmem:[#allocation2 + $0x294] sm:$0xff]
    %v156 = vld [vmem:[#allocation2 + $0x29c] sm:$0xf]
    %v157 = vld [vmem:[#allocation2 + $0x2a0] sm:$0xff]
    %v158 = vld [vmem:[#allocation2 + $0x2a8] sm:$0xf]
    %v159 = vld [vmem:[#allocation2 + $0x2ac] sm:$0xff]
    %v160 = vld [vmem:[#allocation2 + $0x2b4] sm:$0xf]
    %v161 = vld [vmem:[#allocation2 + $0x2b8] sm:$0xff]
    %v162 = vld [vmem:[#allocation2 + $0x2c0] sm:$0xf]
    %v163 = vld [vmem:[#allocation2 + $0x2c4] sm:$0xff]
    %v164 = vld [vmem:[#allocation2 + $0x2cc] sm:$0xf]
    %v165 = vld [vmem:[#allocation2 + $0x2d0] sm:$0xff]
    %v166 = vld [vmem:[#allocation2 + $0x2d8] sm:$0xf]
    %v167 = vld [vmem:[#allocation2 + $0x2dc] sm:$0xff]
    %v168 = vld [vmem:[#allocation2 + $0x2e4] sm:$0xf]
    %v169 = vld [vmem:[#allocation2 + $0x2e8] sm:$0xff]
    %v170 = vld [vmem:[#allocation2 + $0x2f0] sm:$0xf]
    %v171 = vld [vmem:[#allocation2 + $0x2f4] sm:$0xff]
    %v172 = vld [vmem:[#allocation2 + $0x2fc] sm:$0xf]
    %v173 = vld [vmem:[#allocation2 + $0x300] sm:$0xff]
    %v174 = vld [vmem:[#allocation2 + $0x308] sm:$0xf]
    %v175 = vld [vmem:[#allocation2 + $0x30c] sm:$0xff]
    %v176 = vld [vmem:[#allocation2 + $0x314] sm:$0xf]
    %v177 = vld [vmem:[#allocation2 + $0x318] sm:$0xff]
    %v178 = vld [vmem:[#allocation2 + $0x320] sm:$0xf]
    %v179 = vld [vmem:[#allocation2 + $0x324] sm:$0xff]
    %v180 = vld [vmem:[#allocation2 + $0x32c] sm:$0xf]
    %v181 = vld [vmem:[#allocation2 + $0x330] sm:$0xff]
    %v182 = vld [vmem:[#allocation2 + $0x338] sm:$0xf]
    %v183 = vld [vmem:[#allocation2 + $0x33c] sm:$0xff]
    %v184 = vld [vmem:[#allocation2 + $0x344] sm:$0xf]
    %v185 = vld [vmem:[#allocation2 + $0x348] sm:$0xff]
    %v186 = vld [vmem:[#allocation2 + $0x350] sm:$0xf]
    %v187 = vld [vmem:[#allocation2 + $0x354] sm:$0xff]
    %v188 = vld [vmem:[#allocation2 + $0x35c] sm:$0xf]
    %v189 = vld [vmem:[#allocation2 + $0x360] sm:$0xff]
    %v190 = vld [vmem:[#allocation2 + $0x368] sm:$0xf]
    %v191 = vld [vmem:[#allocation2 + $0x36c] sm:$0xff]
    %v192 = vld [vmem:[#allocation2 + $0x374] sm:$0xf]
    %v193 = vld [vmem:[#allocation2 + $0x378] sm:$0xff]
    %v194 = vld [vmem:[#allocation2 + $0x380] sm:$0xf]
    %v195 = vld [vmem:[#allocation2 + $0x384] sm:$0xff]
    %v196 = vld [vmem:[#allocation2 + $0x38c] sm:$0xf]
    %v197 = vld [vmem:[#allocation2 + $0x390] sm:$0xff]
    %v198 = vld [vmem:[#allocation2 + $0x398] sm:$0xf]
    %v199 = vld [vmem:[#allocation2 + $0x39c] sm:$0xff]
    %v200 = vld [vmem:[#allocation2 + $0x3a4] sm:$0xf]
    %v201 = vld [vmem:[#allocation2 + $0x3a8] sm:$0xff]
    %v202 = vld [vmem:[#allocation2 + $0x3b0] sm:$0xf]
    %v203 = vld [vmem:[#allocation2 + $0x3b4] sm:$0xff]
    %v204 = vld [vmem:[#allocation2 + $0x3bc] sm:$0xf]
    %v205 = vld [vmem:[#allocation2 + $0x3c0] sm:$0xff]
    %v206 = vld [vmem:[#allocation2 + $0x3c8] sm:$0xf]
    %v207 = vld [vmem:[#allocation2 + $0x3cc] sm:$0xff]
    %v208 = vld [vmem:[#allocation2 + $0x3d4] sm:$0xf]
    %v209 = vld [vmem:[#allocation2 + $0x3d8] sm:$0xff]
    %v210 = vld [vmem:[#allocation2 + $0x3e0] sm:$0xf]
    %v211 = vld [vmem:[#allocation2 + $0x3e4] sm:$0xff]
    %v212 = vld [vmem:[#allocation2 + $0x3ec] sm:$0xf]
    %v213 = vld [vmem:[#allocation2 + $0x3f0] sm:$0xff]
    %v214 = vld [vmem:[#allocation2 + $0x3f8] sm:$0xf]
    %v215 = vld [vmem:[#allocation2 + $0x3fc] sm:$0xff]
    %v216 = vld [vmem:[#allocation2 + $0x404] sm:$0xf]
    %v217 = vld [vmem:[#allocation2 + $0x408] sm:$0xff]
    %v218 = vld [vmem:[#allocation2 + $0x410] sm:$0xf]
    %v219 = vld [vmem:[#allocation2 + $0x414] sm:$0xff]
    %v220 = vld [vmem:[#allocation2 + $0x41c] sm:$0xf]
    %v221 = vld [vmem:[#allocation2 + $0x420] sm:$0xff]
    %v222 = vld [vmem:[#allocation2 + $0x428] sm:$0xf]
    %v223 = vld [vmem:[#allocation2 + $0x42c] sm:$0xff]
    %v224 = vld [vmem:[#allocation2 + $0x434] sm:$0xf]
    %v225 = vld [vmem:[#allocation2 + $0x438] sm:$0xff]
    %v226 = vld [vmem:[#allocation2 + $0x440] sm:$0xf]
    %v227 = vld [vmem:[#allocation2 + $0x444] sm:$0xff]
    %v228 = vld [vmem:[#allocation2 + $0x44c] sm:$0xf]
    %v229 = vld [vmem:[#allocation2 + $0x450] sm:$0xff]
    %v230 = vld [vmem:[#allocation2 + $0x458] sm:$0xf]
    %v231 = vld [vmem:[#allocation2 + $0x45c] sm:$0xff]
    %v232 = vld [vmem:[#allocation2 + $0x464] sm:$0xf]
    %v233 = vld [vmem:[#allocation2 + $0x468] sm:$0xff]
    %v234 = vld [vmem:[#allocation2 + $0x470] sm:$0xf]
    %v235 = vld [vmem:[#allocation2 + $0x474] sm:$0xff]
    %v236 = vld [vmem:[#allocation2 + $0x47c] sm:$0xf]
    %v237 = vld [vmem:[%s2] sm:$0x7]
    %v239 = vlaneseq
    %v240 = vshrl.u32 %v239, 7
    %v241 = vsub.s32 0, %v240
    %v242 = vrot.slane %v237, %v241
    %v243 = vlaneseq
    %v244 = vshrl.u32 %v243, 7
    %v245 = vsub.s32 1, %v244
    %v246 = vrot.slane %v237, %v245
    %v247 = vlaneseq
    %v248 = vshrl.u32 %v247, 7
    %v249 = vsub.s32 2, %v248
    %v250 = vrot.slane %v237, %v249
    %v257 = vunpack.c.l.b16 %v42
    %v258 = vunpack.c.h.b16 %v42
    %v259 = vunpack.c.l.b16 %v43
    %v260 = vunpack.c.h.b16 %v43
    %v261 = vunpack.c.l.b16 %v44
    %v262 = vunpack.c.h.b16 %v44
    %v263 = vpack.c.b16 %v257, %v257
    %v264 = vpack.c.b16 %v258, %v258
    %v265 = vpack.c.b16 %v259, %v259
    %v266 = vpack.c.b16 %v260, %v260
    %v267 = vpack.c.b16 %v261, %v261
    %v268 = vpack.c.b16 %v262, %v262
    %v467 = vunpack.c.l.b16 %v45
    %v468 = vunpack.c.h.b16 %v45
    %v469 = vunpack.c.l.b16 %v46
    %v470 = vunpack.c.l.b16 %v47
    %v471 = vunpack.c.h.b16 %v47
    %v472 = vunpack.c.l.b16 %v48
    %v473 = vunpack.c.l.b16 %v49
    %v474 = vunpack.c.h.b16 %v49
    %v475 = vunpack.c.l.b16 %v50
    %v476 = vunpack.c.l.b16 %v51
    %v477 = vunpack.c.h.b16 %v51
    %v478 = vunpack.c.l.b16 %v52
    %v479 = vunpack.c.l.b16 %v53
    %v480 = vunpack.c.h.b16 %v53
    %v481 = vunpack.c.l.b16 %v54
    %v482 = vunpack.c.l.b16 %v55
    %v483 = vunpack.c.h.b16 %v55
    %v484 = vunpack.c.l.b16 %v56
    %v485 = vunpack.c.l.b16 %v57
    %v486 = vunpack.c.h.b16 %v57
    %v487 = vunpack.c.l.b16 %v58
    %v488 = vunpack.c.l.b16 %v59
    %v489 = vunpack.c.h.b16 %v59
    %v490 = vunpack.c.l.b16 %v60
    %v491 = vunpack.c.l.b16 %v61
    %v492 = vunpack.c.h.b16 %v61
    %v493 = vunpack.c.l.b16 %v62
    %v494 = vunpack.c.l.b16 %v63
    %v495 = vunpack.c.h.b16 %v63
    %v496 = vunpack.c.l.b16 %v64
    %v497 = vunpack.c.l.b16 %v65
    %v498 = vunpack.c.h.b16 %v65
    %v499 = vunpack.c.l.b16 %v66
    %v500 = vunpack.c.l.b16 %v67
    %v501 = vunpack.c.h.b16 %v67
    %v502 = vunpack.c.l.b16 %v68
    %v503 = vunpack.c.l.b16 %v69
    %v504 = vunpack.c.h.b16 %v69
    %v505 = vunpack.c.l.b16 %v70
    %v506 = vunpack.c.l.b16 %v71
    %v507 = vunpack.c.h.b16 %v71
    %v508 = vunpack.c.l.b16 %v72
    %v509 = vunpack.c.l.b16 %v73
    %v510 = vunpack.c.h.b16 %v73
    %v511 = vunpack.c.l.b16 %v74
    %v512 = vunpack.c.l.b16 %v75
    %v513 = vunpack.c.h.b16 %v75
    %v514 = vunpack.c.l.b16 %v76
    %v515 = vunpack.c.l.b16 %v77
    %v516 = vunpack.c.h.b16 %v77
    %v517 = vunpack.c.l.b16 %v78
    %v518 = vunpack.c.l.b16 %v79
    %v519 = vunpack.c.h.b16 %v79
    %v520 = vunpack.c.l.b16 %v80
    %v521 = vunpack.c.l.b16 %v81
    %v522 = vunpack.c.h.b16 %v81
    %v523 = vunpack.c.l.b16 %v82
    %v524 = vunpack.c.l.b16 %v83
    %v525 = vunpack.c.h.b16 %v83
    %v526 = vunpack.c.l.b16 %v84
    %v527 = vunpack.c.l.b16 %v85
    %v528 = vunpack.c.h.b16 %v85
    %v529 = vunpack.c.l.b16 %v86
    %v530 = vunpack.c.l.b16 %v87
    %v531 = vunpack.c.h.b16 %v87
    %v532 = vunpack.c.l.b16 %v88
    %v533 = vunpack.c.l.b16 %v89
    %v534 = vunpack.c.h.b16 %v89
    %v535 = vunpack.c.l.b16 %v90
    %v536 = vunpack.c.l.b16 %v91
    %v537 = vunpack.c.h.b16 %v91
    %v538 = vunpack.c.l.b16 %v92
    %v539 = vunpack.c.l.b16 %v93
    %v540 = vunpack.c.h.b16 %v93
    %v541 = vunpack.c.l.b16 %v94
    %v542 = vunpack.c.l.b16 %v95
    %v543 = vunpack.c.h.b16 %v95
    %v544 = vunpack.c.l.b16 %v96
    %v545 = vunpack.c.l.b16 %v97
    %v546 = vunpack.c.h.b16 %v97
    %v547 = vunpack.c.l.b16 %v98
    %v548 = vunpack.c.l.b16 %v99
    %v549 = vunpack.c.h.b16 %v99
    %v550 = vunpack.c.l.b16 %v100
    %v551 = vunpack.c.l.b16 %v101
    %v552 = vunpack.c.h.b16 %v101
    %v553 = vunpack.c.l.b16 %v102
    %v554 = vunpack.c.l.b16 %v103
    %v555 = vunpack.c.h.b16 %v103
    %v556 = vunpack.c.l.b16 %v104
    %v557 = vunpack.c.l.b16 %v105
    %v558 = vunpack.c.h.b16 %v105
    %v559 = vunpack.c.l.b16 %v106
    %v560 = vunpack.c.l.b16 %v107
    %v561 = vunpack.c.h.b16 %v107
    %v562 = vunpack.c.l.b16 %v108
    %v563 = vunpack.c.l.b16 %v109
    %v564 = vunpack.c.h.b16 %v109
    %v565 = vunpack.c.l.b16 %v110
    %v566 = vunpack.c.l.b16 %v111
    %v567 = vunpack.c.h.b16 %v111
    %v568 = vunpack.c.l.b16 %v112
    %v569 = vunpack.c.l.b16 %v113
    %v570 = vunpack.c.h.b16 %v113
    %v571 = vunpack.c.l.b16 %v114
    %v572 = vunpack.c.l.b16 %v115
    %v573 = vunpack.c.h.b16 %v115
    %v574 = vunpack.c.l.b16 %v116
    %v575 = vunpack.c.l.b16 %v117
    %v576 = vunpack.c.h.b16 %v117
    %v577 = vunpack.c.l.b16 %v118
    %v578 = vunpack.c.l.b16 %v119
    %v579 = vunpack.c.h.b16 %v119
    %v580 = vunpack.c.l.b16 %v120
    %v581 = vunpack.c.l.b16 %v121
    %v582 = vunpack.c.h.b16 %v121
    %v583 = vunpack.c.l.b16 %v122
    %v584 = vunpack.c.l.b16 %v123
    %v585 = vunpack.c.h.b16 %v123
    %v586 = vunpack.c.l.b16 %v124
    %v587 = vunpack.c.l.b16 %v125
    %v588 = vunpack.c.h.b16 %v125
    %v589 = vunpack.c.l.b16 %v126
    %v590 = vunpack.c.l.b16 %v127
    %v591 = vunpack.c.h.b16 %v127
    %v592 = vunpack.c.l.b16 %v128
    %v593 = vunpack.c.l.b16 %v129
    %v594 = vunpack.c.h.b16 %v129
    %v595 = vunpack.c.l.b16 %v130
    %v596 = vunpack.c.l.b16 %v131
    %v597 = vunpack.c.h.b16 %v131
    %v598 = vunpack.c.l.b16 %v132
    %v599 = vunpack.c.l.b16 %v133
    %v600 = vunpack.c.h.b16 %v133
    %v601 = vunpack.c.l.b16 %v134
    %v602 = vunpack.c.l.b16 %v135
    %v603 = vunpack.c.h.b16 %v135
    %v604 = vunpack.c.l.b16 %v136
    %v605 = vunpack.c.l.b16 %v137
    %v606 = vunpack.c.h.b16 %v137
    %v607 = vunpack.c.l.b16 %v138
    %v608 = vunpack.c.l.b16 %v139
    %v609 = vunpack.c.h.b16 %v139
    %v610 = vunpack.c.l.b16 %v140
    %v611 = vunpack.c.l.b16 %v141
    %v612 = vunpack.c.h.b16 %v141
    %v613 = vunpack.c.l.b16 %v142
    %v614 = vunpack.c.l.b16 %v143
    %v615 = vunpack.c.h.b16 %v143
    %v616 = vunpack.c.l.b16 %v144
    %v617 = vunpack.c.l.b16 %v145
    %v618 = vunpack.c.h.b16 %v145
    %v619 = vunpack.c.l.b16 %v146
    %v620 = vunpack.c.l.b16 %v147
    %v621 = vunpack.c.h.b16 %v147
    %v622 = vunpack.c.l.b16 %v148
    %v623 = vunpack.c.l.b16 %v149
    %v624 = vunpack.c.h.b16 %v149
    %v625 = vunpack.c.l.b16 %v150
    %v626 = vunpack.c.l.b16 %v151
    %v627 = vunpack.c.h.b16 %v151
    %v628 = vunpack.c.l.b16 %v152
    %v629 = vunpack.c.l.b16 %v153
    %v630 = vunpack.c.h.b16 %v153
    %v631 = vunpack.c.l.b16 %v154
    %v632 = vunpack.c.l.b16 %v155
    %v633 = vunpack.c.h.b16 %v155
    %v634 = vunpack.c.l.b16 %v156
    %v635 = vunpack.c.l.b16 %v157
    %v636 = vunpack.c.h.b16 %v157
    %v637 = vunpack.c.l.b16 %v158
    %v638 = vunpack.c.l.b16 %v159
    %v639 = vunpack.c.h.b16 %v159
    %v640 = vunpack.c.l.b16 %v160
    %v641 = vunpack.c.l.b16 %v161
    %v642 = vunpack.c.h.b16 %v161
    %v643 = vunpack.c.l.b16 %v162
    %v644 = vunpack.c.l.b16 %v163
    %v645 = vunpack.c.h.b16 %v163
    %v646 = vunpack.c.l.b16 %v164
    %v647 = vunpack.c.l.b16 %v165
    %v648 = vunpack.c.h.b16 %v165
    %v649 = vunpack.c.l.b16 %v166
    %v650 = vunpack.c.l.b16 %v167
    %v651 = vunpack.c.h.b16 %v167
    %v652 = vunpack.c.l.b16 %v168
    %v653 = vunpack.c.l.b16 %v169
    %v654 = vunpack.c.h.b16 %v169
    %v655 = vunpack.c.l.b16 %v170
    %v656 = vunpack.c.l.b16 %v171
    %v657 = vunpack.c.h.b16 %v171
    %v658 = vunpack.c.l.b16 %v172
    %v659 = vunpack.c.l.b16 %v173
    %v660 = vunpack.c.h.b16 %v173
    %v661 = vunpack.c.l.b16 %v174
    %v662 = vunpack.c.l.b16 %v175
    %v663 = vunpack.c.h.b16 %v175
    %v664 = vunpack.c.l.b16 %v176
    %v665 = vunpack.c.l.b16 %v177
    %v666 = vunpack.c.h.b16 %v177
    %v667 = vunpack.c.l.b16 %v178
    %v668 = vunpack.c.l.b16 %v179
    %v669 = vunpack.c.h.b16 %v179
    %v670 = vunpack.c.l.b16 %v180
    %v671 = vunpack.c.l.b16 %v181
    %v672 = vunpack.c.h.b16 %v181
    %v673 = vunpack.c.l.b16 %v182
    %v674 = vunpack.c.l.b16 %v183
    %v675 = vunpack.c.h.b16 %v183
    %v676 = vunpack.c.l.b16 %v184
    %v677 = vunpack.c.l.b16 %v185
    %v678 = vunpack.c.h.b16 %v185
    %v679 = vunpack.c.l.b16 %v186
    %v680 = vunpack.c.l.b16 %v187
    %v681 = vunpack.c.h.b16 %v187
    %v682 = vunpack.c.l.b16 %v188
    %v683 = vunpack.c.l.b16 %v189
    %v684 = vunpack.c.h.b16 %v189
    %v685 = vunpack.c.l.b16 %v190
    %v686 = vunpack.c.l.b16 %v191
    %v687 = vunpack.c.h.b16 %v191
    %v688 = vunpack.c.l.b16 %v192
    %v689 = vunpack.c.l.b16 %v193
    %v690 = vunpack.c.h.b16 %v193
    %v691 = vunpack.c.l.b16 %v194
    %v692 = vunpack.c.l.b16 %v195
    %v693 = vunpack.c.h.b16 %v195
    %v694 = vunpack.c.l.b16 %v196
    %v695 = vunpack.c.l.b16 %v197
    %v696 = vunpack.c.h.b16 %v197
    %v697 = vunpack.c.l.b16 %v198
    %v698 = vunpack.c.l.b16 %v199
    %v699 = vunpack.c.h.b16 %v199
    %v700 = vunpack.c.l.b16 %v200
    %v701 = vunpack.c.l.b16 %v201
    %v702 = vunpack.c.h.b16 %v201
    %v703 = vunpack.c.l.b16 %v202
    %v704 = vunpack.c.l.b16 %v203
    %v705 = vunpack.c.h.b16 %v203
    %v706 = vunpack.c.l.b16 %v204
    %v707 = vunpack.c.l.b16 %v205
    %v708 = vunpack.c.h.b16 %v205
    %v709 = vunpack.c.l.b16 %v206
    %v710 = vunpack.c.l.b16 %v207
    %v711 = vunpack.c.h.b16 %v207
    %v712 = vunpack.c.l.b16 %v208
    %v713 = vunpack.c.l.b16 %v209
    %v714 = vunpack.c.h.b16 %v209
    %v715 = vunpack.c.l.b16 %v210
    %v716 = vunpack.c.l.b16 %v211
    %v717 = vunpack.c.h.b16 %v211
    %v718 = vunpack.c.l.b16 %v212
    %v719 = vunpack.c.l.b16 %v213
    %v720 = vunpack.c.h.b16 %v213
    %v721 = vunpack.c.l.b16 %v214
    %v722 = vunpack.c.l.b16 %v215
    %v723 = vunpack.c.h.b16 %v215
    %v724 = vunpack.c.l.b16 %v216
    %v725 = vunpack.c.l.b16 %v217
    %v726 = vunpack.c.h.b16 %v217
    %v727 = vunpack.c.l.b16 %v218
    %v728 = vunpack.c.l.b16 %v219
    %v729 = vunpack.c.h.b16 %v219
    %v730 = vunpack.c.l.b16 %v220
    %v731 = vunpack.c.l.b16 %v221
    %v732 = vunpack.c.h.b16 %v221
    %v733 = vunpack.c.l.b16 %v222
    %v734 = vunpack.c.l.b16 %v223
    %v735 = vunpack.c.h.b16 %v223
    %v736 = vunpack.c.l.b16 %v224
    %v737 = vunpack.c.l.b16 %v225
    %v738 = vunpack.c.h.b16 %v225
    %v739 = vunpack.c.l.b16 %v226
    %v740 = vunpack.c.l.b16 %v227
    %v741 = vunpack.c.h.b16 %v227
    %v742 = vunpack.c.l.b16 %v228
    %v743 = vunpack.c.l.b16 %v229
    %v744 = vunpack.c.h.b16 %v229
    %v745 = vunpack.c.l.b16 %v230
    %v746 = vunpack.c.l.b16 %v231
    %v747 = vunpack.c.h.b16 %v231
    %v748 = vunpack.c.l.b16 %v232
    %v749 = vunpack.c.l.b16 %v233
    %v750 = vunpack.c.h.b16 %v233
    %v751 = vunpack.c.l.b16 %v234
    %v752 = vunpack.c.l.b16 %v235
    %v753 = vunpack.c.h.b16 %v235
    %v754 = vunpack.c.l.b16 %v236
    %v755 = vpack.c.b16 %v470, %v467
    %v756 = vpack.c.b16 %v471, %v468
    %v757 = vpack.c.b16 %v472, %v469
    %v758 = vpack.c.b16 %v476, %v473
    %v759 = vpack.c.b16 %v477, %v474
    %v760 = vpack.c.b16 %v478, %v475
    %v761 = vpack.c.b16 %v482, %v479
    %v762 = vpack.c.b16 %v483, %v480
    %v763 = vpack.c.b16 %v484, %v481
    %v764 = vpack.c.b16 %v488, %v485
    %v765 = vpack.c.b16 %v489, %v486
    %v766 = vpack.c.b16 %v490, %v487
    %v767 = vpack.c.b16 %v494, %v491
    %v768 = vpack.c.b16 %v495, %v492
    %v769 = vpack.c.b16 %v496, %v493
    %v770 = vpack.c.b16 %v500, %v497
    %v771 = vpack.c.b16 %v501, %v498
    %v772 = vpack.c.b16 %v502, %v499
    %v773 = vpack.c.b16 %v506, %v503
    %v774 = vpack.c.b16 %v507, %v504
    %v775 = vpack.c.b16 %v508, %v505
    %v776 = vpack.c.b16 %v512, %v509
    %v777 = vpack.c.b16 %v513, %v510
    %v778 = vpack.c.b16 %v514, %v511
    %v779 = vpack.c.b16 %v518, %v515
    %v780 = vpack.c.b16 %v519, %v516
    %v781 = vpack.c.b16 %v520, %v517
    %v782 = vpack.c.b16 %v524, %v521
    %v783 = vpack.c.b16 %v525, %v522
    %v784 = vpack.c.b16 %v526, %v523
    %v785 = vpack.c.b16 %v530, %v527
    %v786 = vpack.c.b16 %v531, %v528
    %v787 = vpack.c.b16 %v532, %v529
    %v788 = vpack.c.b16 %v536, %v533
    %v789 = vpack.c.b16 %v537, %v534
    %v790 = vpack.c.b16 %v538, %v535
    %v791 = vpack.c.b16 %v542, %v539
    %v792 = vpack.c.b16 %v543, %v540
    %v793 = vpack.c.b16 %v544, %v541
    %v794 = vpack.c.b16 %v548, %v545
    %v795 = vpack.c.b16 %v549, %v546
    %v796 = vpack.c.b16 %v550, %v547
    %v797 = vpack.c.b16 %v554, %v551
    %v798 = vpack.c.b16 %v555, %v552
    %v799 = vpack.c.b16 %v556, %v553
    %v800 = vpack.c.b16 %v560, %v557
    %v801 = vpack.c.b16 %v561, %v558
    %v802 = vpack.c.b16 %v562, %v559
    %v803 = vpack.c.b16 %v566, %v563
    %v804 = vpack.c.b16 %v567, %v564
    %v805 = vpack.c.b16 %v568, %v565
    %v806 = vpack.c.b16 %v572, %v569
    %v807 = vpack.c.b16 %v573, %v570
    %v808 = vpack.c.b16 %v574, %v571
    %v809 = vpack.c.b16 %v578, %v575
    %v810 = vpack.c.b16 %v579, %v576
    %v811 = vpack.c.b16 %v580, %v577
    %v812 = vpack.c.b16 %v584, %v581
    %v813 = vpack.c.b16 %v585, %v582
    %v814 = vpack.c.b16 %v586, %v583
    %v815 = vpack.c.b16 %v590, %v587
    %v816 = vpack.c.b16 %v591, %v588
    %v817 = vpack.c.b16 %v592, %v589
    %v818 = vpack.c.b16 %v596, %v593
    %v819 = vpack.c.b16 %v597, %v594
    %v820 = vpack.c.b16 %v598, %v595
    %v821 = vpack.c.b16 %v602, %v599
    %v822 = vpack.c.b16 %v603, %v600
    %v823 = vpack.c.b16 %v604, %v601
    %v824 = vpack.c.b16 %v608, %v605
    %v825 = vpack.c.b16 %v609, %v606
    %v826 = vpack.c.b16 %v610, %v607
    %v827 = vpack.c.b16 %v614, %v611
    %v828 = vpack.c.b16 %v615, %v612
    %v829 = vpack.c.b16 %v616, %v613
    %v830 = vpack.c.b16 %v620, %v617
    %v831 = vpack.c.b16 %v621, %v618
    %v832 = vpack.c.b16 %v622, %v619
    %v833 = vpack.c.b16 %v626, %v623
    %v834 = vpack.c.b16 %v627, %v624
    %v835 = vpack.c.b16 %v628, %v625
    %v836 = vpack.c.b16 %v632, %v629
    %v837 = vpack.c.b16 %v633, %v630
    %v838 = vpack.c.b16 %v634, %v631
    %v839 = vpack.c.b16 %v638, %v635
    %v840 = vpack.c.b16 %v639, %v636
    %v841 = vpack.c.b16 %v640, %v637
    %v842 = vpack.c.b16 %v644, %v641
    %v843 = vpack.c.b16 %v645, %v642
    %v844 = vpack.c.b16 %v646, %v643
    %v845 = vpack.c.b16 %v650, %v647
    %v846 = vpack.c.b16 %v651, %v648
    %v847 = vpack.c.b16 %v652, %v649
    %v848 = vpack.c.b16 %v656, %v653
    %v849 = vpack.c.b16 %v657, %v654
    %v850 = vpack.c.b16 %v658, %v655
    %v851 = vpack.c.b16 %v662, %v659
    %v852 = vpack.c.b16 %v663, %v660
    %v853 = vpack.c.b16 %v664, %v661
    %v854 = vpack.c.b16 %v668, %v665
    %v855 = vpack.c.b16 %v669, %v666
    %v856 = vpack.c.b16 %v670, %v667
    %v857 = vpack.c.b16 %v674, %v671
    %v858 = vpack.c.b16 %v675, %v672
    %v859 = vpack.c.b16 %v676, %v673
    %v860 = vpack.c.b16 %v680, %v677
    %v861 = vpack.c.b16 %v681, %v678
    %v862 = vpack.c.b16 %v682, %v679
    %v863 = vpack.c.b16 %v686, %v683
    %v864 = vpack.c.b16 %v687, %v684
    %v865 = vpack.c.b16 %v688, %v685
    %v866 = vpack.c.b16 %v692, %v689
    %v867 = vpack.c.b16 %v693, %v690
    %v868 = vpack.c.b16 %v694, %v691
    %v869 = vpack.c.b16 %v698, %v695
    %v870 = vpack.c.b16 %v699, %v696
    %v871 = vpack.c.b16 %v700, %v697
    %v872 = vpack.c.b16 %v704, %v701
    %v873 = vpack.c.b16 %v705, %v702
    %v874 = vpack.c.b16 %v706, %v703
    %v875 = vpack.c.b16 %v710, %v707
    %v876 = vpack.c.b16 %v711, %v708
    %v877 = vpack.c.b16 %v712, %v709
    %v878 = vpack.c.b16 %v716, %v713
    %v879 = vpack.c.b16 %v717, %v714
    %v880 = vpack.c.b16 %v718, %v715
    %v881 = vpack.c.b16 %v722, %v719
    %v882 = vpack.c.b16 %v723, %v720
    %v883 = vpack.c.b16 %v724, %v721
    %v884 = vpack.c.b16 %v728, %v725
    %v885 = vpack.c.b16 %v729, %v726
    %v886 = vpack.c.b16 %v730, %v727
    %v887 = vpack.c.b16 %v734, %v731
    %v888 = vpack.c.b16 %v735, %v732
    %v889 = vpack.c.b16 %v736, %v733
    %v890 = vpack.c.b16 %v740, %v737
    %v891 = vpack.c.b16 %v741, %v738
    %v892 = vpack.c.b16 %v742, %v739
    %v893 = vpack.c.b16 %v746, %v743
    %v894 = vpack.c.b16 %v747, %v744
    %v895 = vpack.c.b16 %v748, %v745
    %v896 = vpack.c.b16 %v752, %v749
    %v897 = vpack.c.b16 %v753, %v750
    %v898 = vpack.c.b16 %v754, %v751
    %1043 = vmatprep.subr.bf16.mxu0 %v756
    %1044 = vmatpush1.bf16.msra.mxu0 %v755
    %1045 = vmatprep.subr.bf16.mxu0 %v759
    %1046 = vmatpush1.bf16.msra.mxu0 %v758
    %1047 = vmatprep.subr.bf16.mxu0 %v762
    %1048 = vmatpush1.bf16.msra.mxu0 %v761
    %1049 = vmatprep.subr.bf16.mxu0 %v765
    %1050 = vmatpush1.bf16.msra.mxu0 %v764
    %1051 = vmatprep.subr.bf16.mxu0 %v768
    %1052 = vmatpush1.bf16.msra.mxu0 %v767
    %1053 = vmatprep.subr.bf16.mxu0 %v771
    %1054 = vmatpush1.bf16.msra.mxu0 %v770
    %1055 = vmatprep.subr.bf16.mxu0 %v774
    %1056 = vmatpush1.bf16.msra.mxu0 %v773
    %1057 = vmatprep.subr.bf16.mxu0 %v777
    %1058 = vmatpush1.bf16.msra.mxu0 %v776
    %1059 = vmatprep.subr.bf16.mxu0 %v780
    %1060 = vmatpush1.bf16.msra.mxu0 %v779
    %1061 = vmatprep.subr.bf16.mxu0 %v783
    %1062 = vmatpush1.bf16.msra.mxu0 %v782
    %1063 = vmatprep.subr.bf16.mxu0 %v786
    %1064 = vmatpush1.bf16.msra.mxu0 %v785
    %1065 = vmatprep.subr.bf16.mxu0 %v789
    %1066 = vmatpush1.bf16.msra.mxu0 %v788
    %1067 = vmatprep.subr.bf16.mxu0 %v792
    %1068 = vmatpush1.bf16.msra.mxu0 %v791
    %1069 = vmatprep.subr.bf16.mxu0 %v795
    %1070 = vmatpush1.bf16.msra.mxu0 %v794
    %1071 = vmatprep.subr.bf16.mxu0 %v798
    %1072 = vmatpush1.bf16.msra.mxu0 %v797
    %1073 = vmatprep.subr.bf16.mxu0 %v801
    %1074 = vmatpush1.bf16.msra.mxu0 %v800
    %1075 = vmatprep.mubr.bf16.mxu0 %v264
    %1076 = vmatmul.mubr.bf16.gmra.mrb[0].mxu0 %v263
    %v1077 = vpop.f32.mrb[0].mxu0
    %v1078 = vadd.f32 %v242, %v1077
    %v1079 = vpop.f32.mrb[0].mxu0
    %v1080 = vadd.f32 %v246, %v1079
    %v1081 = vpop.f32.mrb[0].mxu0
    %v1082 = vpop.f32.mrb[0].mxu0
    %1083 = vdwg.mxu0
    %1084 = vmatprep.subr.bf16.mxu0 %v804
    %1085 = vmatpush1.bf16.msra.mxu0 %v803
    %1086 = vmatprep.subr.bf16.mxu0 %v807
    %1087 = vmatpush1.bf16.msra.mxu0 %v806
    %1088 = vmatprep.subr.bf16.mxu0 %v810
    %1089 = vmatpush1.bf16.msra.mxu0 %v809
    %1090 = vmatprep.subr.bf16.mxu0 %v813
    %1091 = vmatpush1.bf16.msra.mxu0 %v812
    %1092 = vmatprep.subr.bf16.mxu0 %v816
    %1093 = vmatpush1.bf16.msra.mxu0 %v815
    %1094 = vmatprep.subr.bf16.mxu0 %v819
    %1095 = vmatpush1.bf16.msra.mxu0 %v818
    %1096 = vmatprep.subr.bf16.mxu0 %v822
    %1097 = vmatpush1.bf16.msra.mxu0 %v821
    %1098 = vmatprep.subr.bf16.mxu0 %v825
    %1099 = vmatpush1.bf16.msra.mxu0 %v824
    %1100 = vmatprep.subr.bf16.mxu0 %v828
    %1101 = vmatpush1.bf16.msra.mxu0 %v827
    %1102 = vmatprep.subr.bf16.mxu0 %v831
    %1103 = vmatpush1.bf16.msra.mxu0 %v830
    %1104 = vmatprep.subr.bf16.mxu0 %v834
    %1105 = vmatpush1.bf16.msra.mxu0 %v833
    %1106 = vmatprep.subr.bf16.mxu0 %v837
    %1107 = vmatpush1.bf16.msra.mxu0 %v836
    %1108 = vmatprep.subr.bf16.mxu0 %v840
    %1109 = vmatpush1.bf16.msra.mxu0 %v839
    %1110 = vmatprep.subr.bf16.mxu0 %v843
    %1111 = vmatpush1.bf16.msra.mxu0 %v842
    %1112 = vmatprep.subr.bf16.mxu0 %v846
    %1113 = vmatpush1.bf16.msra.mxu0 %v845
    %1114 = vmatprep.subr.bf16.mxu0 %v849
    %1115 = vmatpush1.bf16.msra.mxu0 %v848
    %1116 = vmatprep.mubr.bf16.mxu0 %v266
    %1117 = vmatmul.mubr.bf16.gmra.mrb[0].mxu0 %v265
    %v1118 = vpop.f32.mrb[0].mxu0
    %v1119 = vadd.f32 %v1078, %v1118
    %v1120 = vpop.f32.mrb[0].mxu0
    %v1121 = vadd.f32 %v1080, %v1120
    %v1122 = vpop.f32.mrb[0].mxu0
    %v1123 = vpop.f32.mrb[0].mxu0
    %1124 = vdwg.mxu0
    %1125 = vmatprep.subr.bf16.mxu0 %v852
    %1126 = vmatpush1.bf16.msra.mxu0 %v851
    %1127 = vmatprep.subr.bf16.mxu0 %v855
    %1128 = vmatpush1.bf16.msra.mxu0 %v854
    %1129 = vmatprep.subr.bf16.mxu0 %v858
    %1130 = vmatpush1.bf16.msra.mxu0 %v857
    %1131 = vmatprep.subr.bf16.mxu0 %v861
    %1132 = vmatpush1.bf16.msra.mxu0 %v860
    %1133 = vmatprep.subr.bf16.mxu0 %v864
    %1134 = vmatpush1.bf16.msra.mxu0 %v863
    %1135 = vmatprep.subr.bf16.mxu0 %v867
    %1136 = vmatpush1.bf16.msra.mxu0 %v866
    %1137 = vmatprep.subr.bf16.mxu0 %v870
    %1138 = vmatpush1.bf16.msra.mxu0 %v869
    %1139 = vmatprep.subr.bf16.mxu0 %v873
    %1140 = vmatpush1.bf16.msra.mxu0 %v872
    %1141 = vmatprep.subr.bf16.mxu0 %v876
    %1142 = vmatpush1.bf16.msra.mxu0 %v875
    %1143 = vmatprep.subr.bf16.mxu0 %v879
    %1144 = vmatpush1.bf16.msra.mxu0 %v878
    %1145 = vmatprep.subr.bf16.mxu0 %v882
    %1146 = vmatpush1.bf16.msra.mxu0 %v881
    %1147 = vmatprep.subr.bf16.mxu0 %v885
    %1148 = vmatpush1.bf16.msra.mxu0 %v884
    %1149 = vmatprep.subr.bf16.mxu0 %v888
    %1150 = vmatpush1.bf16.msra.mxu0 %v887
    %1151 = vmatprep.subr.bf16.mxu0 %v891
    %1152 = vmatpush1.bf16.msra.mxu0 %v890
    %1153 = vmatprep.subr.bf16.mxu0 %v894
    %1154 = vmatpush1.bf16.msra.mxu0 %v893
    %1155 = vmatprep.subr.bf16.mxu0 %v897
    %1156 = vmatpush1.bf16.msra.mxu0 %v896
    %1157 = vmatprep.mubr.bf16.mxu0 %v268
    %1158 = vmatmul.mubr.bf16.gmra.mrb[0].mxu0 %v267
    %v1159 = vpop.f32.mrb[0].mxu0
    %v1160 = vadd.f32 %v1119, %v1159
    %v1161 = vpop.f32.mrb[0].mxu0
    %v1162 = vadd.f32 %v1121, %v1161
    %v1163 = vpop.f32.mrb[0].mxu0
    %v1164 = vpop.f32.mrb[0].mxu0
    %1165 = vdwg.mxu0
    %1166 = vmatprep.subr.bf16.mxu0 0
    %1167 = vmatpush1.bf16.msra.mxu0 %v757
    %1168 = vmatprep.subr.bf16.mxu0 0
    %1169 = vmatpush1.bf16.msra.mxu0 %v760
    %1170 = vmatprep.subr.bf16.mxu0 0
    %1171 = vmatpush1.bf16.msra.mxu0 %v763
    %1172 = vmatprep.subr.bf16.mxu0 0
    %1173 = vmatpush1.bf16.msra.mxu0 %v766
    %1174 = vmatprep.subr.bf16.mxu0 0
    %1175 = vmatpush1.bf16.msra.mxu0 %v769
    %1176 = vmatprep.subr.bf16.mxu0 0
    %1177 = vmatpush1.bf16.msra.mxu0 %v772
    %1178 = vmatprep.subr.bf16.mxu0 0
    %1179 = vmatpush1.bf16.msra.mxu0 %v775
    %1180 = vmatprep.subr.bf16.mxu0 0
    %1181 = vmatpush1.bf16.msra.mxu0 %v778
    %1182 = vmatprep.subr.bf16.mxu0 0
    %1183 = vmatpush1.bf16.msra.mxu0 %v781
    %1184 = vmatprep.subr.bf16.mxu0 0
    %1185 = vmatpush1.bf16.msra.mxu0 %v784
    %1186 = vmatprep.subr.bf16.mxu0 0
    %1187 = vmatpush1.bf16.msra.mxu0 %v787
    %1188 = vmatprep.subr.bf16.mxu0 0
    %1189 = vmatpush1.bf16.msra.mxu0 %v790
    %1190 = vmatprep.subr.bf16.mxu0 0
    %1191 = vmatpush1.bf16.msra.mxu0 %v793
    %1192 = vmatprep.subr.bf16.mxu0 0
    %1193 = vmatpush1.bf16.msra.mxu0 %v796
    %1194 = vmatprep.subr.bf16.mxu0 0
    %1195 = vmatpush1.bf16.msra.mxu0 %v799
    %1196 = vmatprep.subr.bf16.mxu0 0
    %1197 = vmatpush1.bf16.msra.mxu0 %v802
    %1198 = vmatprep.mubr.bf16.mxu0 %v264
    %1199 = vmatmul.mubr.bf16.gmra.mrb[0].mxu0 %v263
    %v1200 = vpop.f32.mrb[0].mxu0
    %v1201 = vadd.f32 %v250, %v1200
    %v1202 = vpop.f32.mrb[0].mxu0
    %v1203 = vpop.f32.mrb[0].mxu0
    %v1204 = vpop.f32.mrb[0].mxu0
    %1205 = vdwg.mxu0
    %1206 = vmatprep.subr.bf16.mxu0 0
    %1207 = vmatpush1.bf16.msra.mxu0 %v805
    %1208 = vmatprep.subr.bf16.mxu0 0
    %1209 = vmatpush1.bf16.msra.mxu0 %v808
    %1210 = vmatprep.subr.bf16.mxu0 0
    %1211 = vmatpush1.bf16.msra.mxu0 %v811
    %1212 = vmatprep.subr.bf16.mxu0 0
    %1213 = vmatpush1.bf16.msra.mxu0 %v814
    %1214 = vmatprep.subr.bf16.mxu0 0
    %1215 = vmatpush1.bf16.msra.mxu0 %v817
    %1216 = vmatprep.subr.bf16.mxu0 0
    %1217 = vmatpush1.bf16.msra.mxu0 %v820
    %1218 = vmatprep.subr.bf16.mxu0 0
    %1219 = vmatpush1.bf16.msra.mxu0 %v823
    %1220 = vmatprep.subr.bf16.mxu0 0
    %1221 = vmatpush1.bf16.msra.mxu0 %v826
    %1222 = vmatprep.subr.bf16.mxu0 0
    %1223 = vmatpush1.bf16.msra.mxu0 %v829
    %1224 = vmatprep.subr.bf16.mxu0 0
    %1225 = vmatpush1.bf16.msra.mxu0 %v832
    %1226 = vmatprep.subr.bf16.mxu0 0
    %1227 = vmatpush1.bf16.msra.mxu0 %v835
    %1228 = vmatprep.subr.bf16.mxu0 0
    %1229 = vmatpush1.bf16.msra.mxu0 %v838
    %1230 = vmatprep.subr.bf16.mxu0 0
    %1231 = vmatpush1.bf16.msra.mxu0 %v841
    %1232 = vmatprep.subr.bf16.mxu0 0
    %1233 = vmatpush1.bf16.msra.mxu0 %v844
    %1234 = vmatprep.subr.bf16.mxu0 0
    %1235 = vmatpush1.bf16.msra.mxu0 %v847
    %1236 = vmatprep.subr.bf16.mxu0 0
    %1237 = vmatpush1.bf16.msra.mxu0 %v850
    %1238 = vmatprep.mubr.bf16.mxu0 %v266
    %1239 = vmatmul.mubr.bf16.gmra.mrb[0].mxu0 %v265
    %v1240 = vpop.f32.mrb[0].mxu0
    %v1241 = vadd.f32 %v1201, %v1240
    %v1242 = vpop.f32.mrb[0].mxu0
    %v1243 = vpop.f32.mrb[0].mxu0
    %v1244 = vpop.f32.mrb[0].mxu0
    %1245 = vdwg.mxu0
    %1246 = vmatprep.subr.bf16.mxu0 0
    %1247 = vmatpush1.bf16.msra.mxu0 %v853
    %1248 = vmatprep.subr.bf16.mxu0 0
    %1249 = vmatpush1.bf16.msra.mxu0 %v856
    %1250 = vmatprep.subr.bf16.mxu0 0
    %1251 = vmatpush1.bf16.msra.mxu0 %v859
    %1252 = vmatprep.subr.bf16.mxu0 0
    %1253 = vmatpush1.bf16.msra.mxu0 %v862
    %1254 = vmatprep.subr.bf16.mxu0 0
    %1255 = vmatpush1.bf16.msra.mxu0 %v865
    %1256 = vmatprep.subr.bf16.mxu0 0
    %1257 = vmatpush1.bf16.msra.mxu0 %v868
    %1258 = vmatprep.subr.bf16.mxu0 0
    %1259 = vmatpush1.bf16.msra.mxu0 %v871
    %1260 = vmatprep.subr.bf16.mxu0 0
    %1261 = vmatpush1.bf16.msra.mxu0 %v874
    %1262 = vmatprep.subr.bf16.mxu0 0
    %1263 = vmatpush1.bf16.msra.mxu0 %v877
    %1264 = vmatprep.subr.bf16.mxu0 0
    %1265 = vmatpush1.bf16.msra.mxu0 %v880
    %1266 = vmatprep.subr.bf16.mxu0 0
    %1267 = vmatpush1.bf16.msra.mxu0 %v883
    %1268 = vmatprep.subr.bf16.mxu0 0
    %1269 = vmatpush1.bf16.msra.mxu0 %v886
    %1270 = vmatprep.subr.bf16.mxu0 0
    %1271 = vmatpush1.bf16.msra.mxu0 %v889
    %1272 = vmatprep.subr.bf16.mxu0 0
    %1273 = vmatpush1.bf16.msra.mxu0 %v892
    %1274 = vmatprep.subr.bf16.mxu0 0
    %1275 = vmatpush1.bf16.msra.mxu0 %v895
    %1276 = vmatprep.subr.bf16.mxu0 0
    %1277 = vmatpush1.bf16.msra.mxu0 %v898
    %1278 = vmatprep.mubr.bf16.mxu0 %v268
    %1279 = vmatmul.mubr.bf16.gmra.mrb[0].mxu0 %v267
    %v1280 = vpop.f32.mrb[0].mxu0
    %v1281 = vadd.f32 %v1241, %v1280
    %v1282 = vpop.f32.mrb[0].mxu0
    %v1283 = vpop.f32.mrb[0].mxu0
    %v1284 = vpop.f32.mrb[0].mxu0
    %1285 = vdwg.mxu0
    %v1286 = vmax.f32 %v1160, 0.0
    %v1287 = vmax.f32 %v1162, 0.0
    %v1288 = vmax.f32 %v1281, 0.0
    %v1289 = vpack.c.bf16 %v1286, %v1286
    %v1290 = vpack.c.bf16 %v1287, %v1287
    %v1291 = vpack.c.bf16 %v1288, %v1288
    %v1292 = vld [vmem:[%s3] sm:$0xff]
    %v1293 = vld [vmem:[%s3 + $0x8] sm:$0xff]
    %v1294 = vld [vmem:[%s3 + $0x10] sm:$0xff]
    %v1295 = vld [vmem:[%s3 + $0x18] sm:$0xff]
    %v1296 = vld [vmem:[%s3 + $0x20] sm:$0xff]
    %v1297 = vld [vmem:[%s3 + $0x28] sm:$0xff]
    %v1298 = vld [vmem:[%s3 + $0x30] sm:$0xff]
    %v1299 = vld [vmem:[%s3 + $0x38] sm:$0xff]
    %v1300 = vld [vmem:[%s3 + $0x40] sm:$0xff]
    %v1301 = vld [vmem:[%s3 + $0x48] sm:$0xff]
    %v1302 = vld [vmem:[%s3 + $0x50] sm:$0xff]
    %v1303 = vld [vmem:[%s3 + $0x58] sm:$0xff]
    %v1304 = vld [vmem:[%s3 + $0x60] sm:$0xff]
    %v1305 = vld [vmem:[%s3 + $0x68] sm:$0xff]
    %v1306 = vld [vmem:[%s3 + $0x70] sm:$0xff]
    %v1307 = vld [vmem:[%s3 + $0x78] sm:$0xff]
    %v1308 = vld [vmem:[%s3 + $0x80] sm:$0xff]
    %v1309 = vld [vmem:[%s3 + $0x88] sm:$0xff]
    %v1310 = vld [vmem:[%s3 + $0x90] sm:$0xff]
    %v1311 = vld [vmem:[%s3 + $0x98] sm:$0xff]
    %v1312 = vld [vmem:[%s3 + $0xa0] sm:$0xff]
    %v1313 = vld [vmem:[%s3 + $0xa8] sm:$0xff]
    %v1314 = vld [vmem:[%s3 + $0xb0] sm:$0xff]
    %v1315 = vld [vmem:[%s3 + $0xb8] sm:$0xff]
    %v1316 = vld [vmem:[%s3 + $0xc0] sm:$0xff]
    %v1317 = vld [vmem:[%s3 + $0xc8] sm:$0xff]
    %v1318 = vld [vmem:[%s3 + $0xd0] sm:$0xff]
    %v1319 = vld [vmem:[%s3 + $0xd8] sm:$0xff]
    %v1320 = vld [vmem:[%s3 + $0xe0] sm:$0xff]
    %v1321 = vld [vmem:[%s3 + $0xe8] sm:$0xff]
    %v1322 = vld [vmem:[%s3 + $0xf0] sm:$0xff]
    %v1323 = vld [vmem:[%s3 + $0xf8] sm:$0xff]
    %v1324 = vld [vmem:[%s3 + $0x100] sm:$0xff]
    %v1325 = vld [vmem:[%s3 + $0x108] sm:$0xff]
    %v1326 = vld [vmem:[%s3 + $0x110] sm:$0xff]
    %v1327 = vld [vmem:[%s3 + $0x118] sm:$0xff]
    %v1328 = vld [vmem:[%s3 + $0x120] sm:$0xff]
    %v1329 = vld [vmem:[%s3 + $0x128] sm:$0xff]
    %v1330 = vld [vmem:[%s3 + $0x130] sm:$0xff]
    %v1331 = vld [vmem:[%s3 + $0x138] sm:$0xff]
    %v1332 = vld [vmem:[%s3 + $0x140] sm:$0xff]
    %v1333 = vld [vmem:[%s3 + $0x148] sm:$0xff]
    %v1334 = vld [vmem:[%s3 + $0x150] sm:$0xff]
    %v1335 = vld [vmem:[%s3 + $0x158] sm:$0xff]
    %v1336 = vld [vmem:[%s3 + $0x160] sm:$0xff]
    %v1337 = vld [vmem:[%s3 + $0x168] sm:$0xff]
    %v1338 = vld [vmem:[%s3 + $0x170] sm:$0xff]
    %v1339 = vld [vmem:[%s3 + $0x178] sm:$0xff]
    %v1340 = vld [vmem:[%s4] sm:$0x3]
    %v1342 = vlaneseq
    %v1343 = vshrl.u32 %v1342, 7
    %v1344 = vsub.s32 0, %v1343
    %v1345 = vrot.slane %v1340, %v1344
    %v1346 = vlaneseq
    %v1347 = vshrl.u32 %v1346, 7
    %v1348 = vsub.s32 1, %v1347
    %v1349 = vrot.slane %v1340, %v1348
    %v1400 = vunpack.c.l.b16 %v1292
    %v1401 = vunpack.c.h.b16 %v1292
    %v1402 = vunpack.c.l.b16 %v1293
    %v1403 = vunpack.c.h.b16 %v1293
    %v1404 = vunpack.c.l.b16 %v1294
    %v1405 = vunpack.c.h.b16 %v1294
    %v1406 = vunpack.c.l.b16 %v1295
    %v1407 = vunpack.c.h.b16 %v1295
    %v1408 = vunpack.c.l.b16 %v1296
    %v1409 = vunpack.c.h.b16 %v1296
    %v1410 = vunpack.c.l.b16 %v1297
    %v1411 = vunpack.c.h.b16 %v1297
    %v1412 = vunpack.c.l.b16 %v1298
    %v1413 = vunpack.c.h.b16 %v1298
    %v1414 = vunpack.c.l.b16 %v1299
    %v1415 = vunpack.c.h.b16 %v1299
    %v1416 = vunpack.c.l.b16 %v1300
    %v1417 = vunpack.c.h.b16 %v1300
    %v1418 = vunpack.c.l.b16 %v1301
    %v1419 = vunpack.c.h.b16 %v1301
    %v1420 = vunpack.c.l.b16 %v1302
    %v1421 = vunpack.c.h.b16 %v1302
    %v1422 = vunpack.c.l.b16 %v1303
    %v1423 = vunpack.c.h.b16 %v1303
    %v1424 = vunpack.c.l.b16 %v1304
    %v1425 = vunpack.c.h.b16 %v1304
    %v1426 = vunpack.c.l.b16 %v1305
    %v1427 = vunpack.c.h.b16 %v1305
    %v1428 = vunpack.c.l.b16 %v1306
    %v1429 = vunpack.c.h.b16 %v1306
    %v1430 = vunpack.c.l.b16 %v1307
    %v1431 = vunpack.c.h.b16 %v1307
    %v1432 = vunpack.c.l.b16 %v1308
    %v1433 = vunpack.c.h.b16 %v1308
    %v1434 = vunpack.c.l.b16 %v1309
    %v1435 = vunpack.c.h.b16 %v1309
    %v1436 = vunpack.c.l.b16 %v1310
    %v1437 = vunpack.c.h.b16 %v1310
    %v1438 = vunpack.c.l.b16 %v1311
    %v1439 = vunpack.c.h.b16 %v1311
    %v1440 = vunpack.c.l.b16 %v1312
    %v1441 = vunpack.c.h.b16 %v1312
    %v1442 = vunpack.c.l.b16 %v1313
    %v1443 = vunpack.c.h.b16 %v1313
    %v1444 = vunpack.c.l.b16 %v1314
    %v1445 = vunpack.c.h.b16 %v1314
    %v1446 = vunpack.c.l.b16 %v1315
    %v1447 = vunpack.c.h.b16 %v1315
    %v1448 = vunpack.c.l.b16 %v1316
    %v1449 = vunpack.c.h.b16 %v1316
    %v1450 = vunpack.c.l.b16 %v1317
    %v1451 = vunpack.c.h.b16 %v1317
    %v1452 = vunpack.c.l.b16 %v1318
    %v1453 = vunpack.c.h.b16 %v1318
    %v1454 = vunpack.c.l.b16 %v1319
    %v1455 = vunpack.c.h.b16 %v1319
    %v1456 = vunpack.c.l.b16 %v1320
    %v1457 = vunpack.c.h.b16 %v1320
    %v1458 = vunpack.c.l.b16 %v1321
    %v1459 = vunpack.c.h.b16 %v1321
    %v1460 = vunpack.c.l.b16 %v1322
    %v1461 = vunpack.c.h.b16 %v1322
    %v1462 = vunpack.c.l.b16 %v1323
    %v1463 = vunpack.c.h.b16 %v1323
    %v1464 = vunpack.c.l.b16 %v1324
    %v1465 = vunpack.c.h.b16 %v1324
    %v1466 = vunpack.c.l.b16 %v1325
    %v1467 = vunpack.c.h.b16 %v1325
    %v1468 = vunpack.c.l.b16 %v1326
    %v1469 = vunpack.c.h.b16 %v1326
    %v1470 = vunpack.c.l.b16 %v1327
    %v1471 = vunpack.c.h.b16 %v1327
    %v1472 = vunpack.c.l.b16 %v1328
    %v1473 = vunpack.c.h.b16 %v1328
    %v1474 = vunpack.c.l.b16 %v1329
    %v1475 = vunpack.c.h.b16 %v1329
    %v1476 = vunpack.c.l.b16 %v1330
    %v1477 = vunpack.c.h.b16 %v1330
    %v1478 = vunpack.c.l.b16 %v1331
    %v1479 = vunpack.c.h.b16 %v1331
    %v1480 = vunpack.c.l.b16 %v1332
    %v1481 = vunpack.c.h.b16 %v1332
    %v1482 = vunpack.c.l.b16 %v1333
    %v1483 = vunpack.c.h.b16 %v1333
    %v1484 = vunpack.c.l.b16 %v1334
    %v1485 = vunpack.c.h.b16 %v1334
    %v1486 = vunpack.c.l.b16 %v1335
    %v1487 = vunpack.c.h.b16 %v1335
    %v1488 = vunpack.c.l.b16 %v1336
    %v1489 = vunpack.c.h.b16 %v1336
    %v1490 = vunpack.c.l.b16 %v1337
    %v1491 = vunpack.c.h.b16 %v1337
    %v1492 = vunpack.c.l.b16 %v1338
    %v1493 = vunpack.c.h.b16 %v1338
    %v1494 = vunpack.c.l.b16 %v1339
    %v1495 = vunpack.c.h.b16 %v1339
    %v1496 = vpack.c.b16 %v1402, %v1400
    %v1497 = vpack.c.b16 %v1403, %v1401
    %v1498 = vpack.c.b16 %v1406, %v1404
    %v1499 = vpack.c.b16 %v1407, %v1405
    %v1500 = vpack.c.b16 %v1410, %v1408
    %v1501 = vpack.c.b16 %v1411, %v1409
    %v1502 = vpack.c.b16 %v1414, %v1412
    %v1503 = vpack.c.b16 %v1415, %v1413
    %v1504 = vpack.c.b16 %v1418, %v1416
    %v1505 = vpack.c.b16 %v1419, %v1417
    %v1506 = vpack.c.b16 %v1422, %v1420
    %v1507 = vpack.c.b16 %v1423, %v1421
    %v1508 = vpack.c.b16 %v1426, %v1424
    %v1509 = vpack.c.b16 %v1427, %v1425
    %v1510 = vpack.c.b16 %v1430, %v1428
    %v1511 = vpack.c.b16 %v1431, %v1429
    %v1512 = vpack.c.b16 %v1434, %v1432
    %v1513 = vpack.c.b16 %v1435, %v1433
    %v1514 = vpack.c.b16 %v1438, %v1436
    %v1515 = vpack.c.b16 %v1439, %v1437
    %v1516 = vpack.c.b16 %v1442, %v1440
    %v1517 = vpack.c.b16 %v1443, %v1441
    %v1518 = vpack.c.b16 %v1446, %v1444
    %v1519 = vpack.c.b16 %v1447, %v1445
    %v1520 = vpack.c.b16 %v1450, %v1448
    %v1521 = vpack.c.b16 %v1451, %v1449
    %v1522 = vpack.c.b16 %v1454, %v1452
    %v1523 = vpack.c.b16 %v1455, %v1453
    %v1524 = vpack.c.b16 %v1458, %v1456
    %v1525 = vpack.c.b16 %v1459, %v1457
    %v1526 = vpack.c.b16 %v1462, %v1460
    %v1527 = vpack.c.b16 %v1463, %v1461
    %v1528 = vpack.c.b16 %v1466, %v1464
    %v1529 = vpack.c.b16 %v1467, %v1465
    %v1530 = vpack.c.b16 %v1470, %v1468
    %v1531 = vpack.c.b16 %v1471, %v1469
    %v1532 = vpack.c.b16 %v1474, %v1472
    %v1533 = vpack.c.b16 %v1475, %v1473
    %v1534 = vpack.c.b16 %v1478, %v1476
    %v1535 = vpack.c.b16 %v1479, %v1477
    %v1536 = vpack.c.b16 %v1482, %v1480
    %v1537 = vpack.c.b16 %v1483, %v1481
    %v1538 = vpack.c.b16 %v1486, %v1484
    %v1539 = vpack.c.b16 %v1487, %v1485
    %v1540 = vpack.c.b16 %v1490, %v1488
    %v1541 = vpack.c.b16 %v1491, %v1489
    %v1542 = vpack.c.b16 %v1494, %v1492
    %v1543 = vpack.c.b16 %v1495, %v1493
    %1592 = vmatprep.subr.bf16.mxu0 %v1497
    %1593 = vmatpush1.bf16.msra.mxu0 %v1496
    %1594 = vmatprep.subr.bf16.mxu0 %v1499
    %1595 = vmatpush1.bf16.msra.mxu0 %v1498
    %1596 = vmatprep.subr.bf16.mxu0 %v1501
    %1597 = vmatpush1.bf16.msra.mxu0 %v1500
    %1598 = vmatprep.subr.bf16.mxu0 %v1503
    %1599 = vmatpush1.bf16.msra.mxu0 %v1502
    %1600 = vmatprep.subr.bf16.mxu0 %v1505
    %1601 = vmatpush1.bf16.msra.mxu0 %v1504
    %1602 = vmatprep.subr.bf16.mxu0 %v1507
    %1603 = vmatpush1.bf16.msra.mxu0 %v1506
    %1604 = vmatprep.subr.bf16.mxu0 %v1509
    %1605 = vmatpush1.bf16.msra.mxu0 %v1508
    %1606 = vmatprep.subr.bf16.mxu0 %v1511
    %1607 = vmatpush1.bf16.msra.mxu0 %v1510
    %1608 = vmatprep.subr.bf16.mxu0 %v1513
    %1609 = vmatpush1.bf16.msra.mxu0 %v1512
    %1610 = vmatprep.subr.bf16.mxu0 %v1515
    %1611 = vmatpush1.bf16.msra.mxu0 %v1514
    %1612 = vmatprep.subr.bf16.mxu0 %v1517
    %1613 = vmatpush1.bf16.msra.mxu0 %v1516
    %1614 = vmatprep.subr.bf16.mxu0 %v1519
    %1615 = vmatpush1.bf16.msra.mxu0 %v1518
    %1616 = vmatprep.subr.bf16.mxu0 %v1521
    %1617 = vmatpush1.bf16.msra.mxu0 %v1520
    %1618 = vmatprep.subr.bf16.mxu0 %v1523
    %1619 = vmatpush1.bf16.msra.mxu0 %v1522
    %1620 = vmatprep.subr.bf16.mxu0 %v1525
    %1621 = vmatpush1.bf16.msra.mxu0 %v1524
    %1622 = vmatprep.subr.bf16.mxu0 %v1527
    %1623 = vmatpush1.bf16.msra.mxu0 %v1526
    %1624 = vmatprep.mubr.bf16.mxu0 %v1290
    %1625 = vmatmul.mubr.bf16.gmra.mrb[0].mxu0 %v1289
    %v1626 = vpop.f32.mrb[0].mxu0
    %v1627 = vadd.f32 %v1345, %v1626
    %v1628 = vpop.f32.mrb[0].mxu0
    %v1629 = vadd.f32 %v1349, %v1628
    %v1630 = vpop.f32.mrb[0].mxu0
    %v1631 = vpop.f32.mrb[0].mxu0
    %1632 = vdwg.mxu0
    %1633 = vmatprep.subr.bf16.mxu0 %v1529
    %1634 = vmatpush1.bf16.msra.mxu0 %v1528
    %1635 = vmatprep.subr.bf16.mxu0 %v1531
    %1636 = vmatpush1.bf16.msra.mxu0 %v1530
    %1637 = vmatprep.subr.bf16.mxu0 %v1533
    %1638 = vmatpush1.bf16.msra.mxu0 %v1532
    %1639 = vmatprep.subr.bf16.mxu0 %v1535
    %1640 = vmatpush1.bf16.msra.mxu0 %v1534
    %1641 = vmatprep.subr.bf16.mxu0 %v1537
    %1642 = vmatpush1.bf16.msra.mxu0 %v1536
    %1643 = vmatprep.subr.bf16.mxu0 %v1539
    %1644 = vmatpush1.bf16.msra.mxu0 %v1538
    %1645 = vmatprep.subr.bf16.mxu0 %v1541
    %1646 = vmatpush1.bf16.msra.mxu0 %v1540
    %1647 = vmatprep.subr.bf16.mxu0 %v1543
    %1648 = vmatpush1.bf16.msra.mxu0 %v1542
    %1649 = vmatprep.subr.bf16.mxu0 0
    %1650 = vmatpush1.bf16.msra.mxu0 0
    %1651 = vmatprep.subr.bf16.mxu0 0
    %1652 = vmatpush1.bf16.msra.mxu0 0
    %1653 = vmatprep.subr.bf16.mxu0 0
    %1654 = vmatpush1.bf16.msra.mxu0 0
    %1655 = vmatprep.subr.bf16.mxu0 0
    %1656 = vmatpush1.bf16.msra.mxu0 0
    %1657 = vmatprep.subr.bf16.mxu0 0
    %1658 = vmatpush1.bf16.msra.mxu0 0
    %1659 = vmatprep.subr.bf16.mxu0 0
    %1660 = vmatpush1.bf16.msra.mxu0 0
    %1661 = vmatprep.subr.bf16.mxu0 0
    %1662 = vmatpush1.bf16.msra.mxu0 0
    %1663 = vmatprep.subr.bf16.mxu0 0
    %1664 = vmatpush1.bf16.msra.mxu0 0
    %1665 = vmatprep.mubr.bf16.mxu0 0
    %1666 = vmatmul.mubr.bf16.gmra.mrb[0].mxu0 %v1291
    %v1667 = vpop.f32.mrb[0].mxu0
    %v1668 = vadd.f32 %v1627, %v1667
    %v1669 = vpop.f32.mrb[0].mxu0
    %v1670 = vadd.f32 %v1629, %v1669
    %v1671 = vpop.f32.mrb[0].mxu0
    %v1672 = vpop.f32.mrb[0].mxu0
    %1673 = vdwg.mxu0
    %v1674 = vmax.f32 %v1668, 0.0
    %v1675 = vmax.f32 %v1670, 0.0
    %v1676 = vpack.c.bf16 %v1674, %v1674
    %v1677 = vpack.c.bf16 %v1675, %v1675
    %v1678 = vld [vmem:[%s5] sm:$0xff]
    %v1679 = vld [vmem:[%s5 + $0x8] sm:$0xff]
    %v1680 = vld [vmem:[%s5 + $0x10] sm:$0xff]
    %v1681 = vld [vmem:[%s5 + $0x18] sm:$0xff]
    %v1682 = vld [vmem:[%s5 + $0x20] sm:$0xff]
    %v1683 = vld [vmem:[%s5 + $0x28] sm:$0xff]
    %v1684 = vld [vmem:[%s5 + $0x30] sm:$0xff]
    %v1685 = vld [vmem:[%s5 + $0x38] sm:$0xff]
    %v1686 = vld [vmem:[%s5 + $0x40] sm:$0xff]
    %v1687 = vld [vmem:[%s5 + $0x48] sm:$0xff]
    %v1688 = vld [vmem:[%s5 + $0x50] sm:$0xff]
    %v1689 = vld [vmem:[%s5 + $0x58] sm:$0xff]
    %v1690 = vld [vmem:[%s5 + $0x60] sm:$0xff]
    %v1691 = vld [vmem:[%s5 + $0x68] sm:$0xff]
    %v1692 = vld [vmem:[%s5 + $0x70] sm:$0xff]
    %v1693 = vld [vmem:[%s5 + $0x78] sm:$0xff]
    %v1694 = vld [vmem:[%s5 + $0x80] sm:$0xff]
    %v1695 = vld [vmem:[%s5 + $0x88] sm:$0xff]
    %v1696 = vld [vmem:[%s5 + $0x90] sm:$0xff]
    %v1697 = vld [vmem:[%s5 + $0x98] sm:$0xff]
    %v1698 = vld [vmem:[%s5 + $0xa0] sm:$0xff]
    %v1699 = vld [vmem:[%s5 + $0xa8] sm:$0xff]
    %v1700 = vld [vmem:[%s5 + $0xb0] sm:$0xff]
    %v1701 = vld [vmem:[%s5 + $0xb8] sm:$0xff]
    %v1702 = vld [vmem:[%s5 + $0xc0] sm:$0xff]
    %v1703 = vld [vmem:[%s5 + $0xc8] sm:$0xff]
    %v1704 = vld [vmem:[%s5 + $0xd0] sm:$0xff]
    %v1705 = vld [vmem:[%s5 + $0xd8] sm:$0xff]
    %v1706 = vld [vmem:[%s5 + $0xe0] sm:$0xff]
    %v1707 = vld [vmem:[%s5 + $0xe8] sm:$0xff]
    %v1708 = vld [vmem:[%s5 + $0xf0] sm:$0xff]
    %v1709 = vld [vmem:[%s5 + $0xf8] sm:$0xff]
    %v1710 = vld [vmem:[%s5 + $0x100] sm:$0xff]
    %v1711 = vld [vmem:[%s5 + $0x108] sm:$0xff]
    %v1712 = vld [vmem:[%s5 + $0x110] sm:$0xff]
    %v1713 = vld [vmem:[%s5 + $0x118] sm:$0xff]
    %v1714 = vld [vmem:[%s5 + $0x120] sm:$0xff]
    %v1715 = vld [vmem:[%s5 + $0x128] sm:$0xff]
    %v1716 = vld [vmem:[%s5 + $0x130] sm:$0xff]
    %v1717 = vld [vmem:[%s5 + $0x138] sm:$0xff]
    %v1718 = vld [vmem:[%s5 + $0x140] sm:$0xff]
    %v1719 = vld [vmem:[%s5 + $0x148] sm:$0xff]
    %v1720 = vld [vmem:[%s5 + $0x150] sm:$0xff]
    %v1721 = vld [vmem:[%s5 + $0x158] sm:$0xff]
    %v1722 = vld [vmem:[%s5 + $0x160] sm:$0xff]
    %v1723 = vld [vmem:[%s5 + $0x168] sm:$0xff]
    %v1724 = vld [vmem:[%s5 + $0x170] sm:$0xff]
    %v1725 = vld [vmem:[%s5 + $0x178] sm:$0xff]
    %v1726 = vld [vmem:[%s5 + $0x180] sm:$0xff]
    %v1727 = vld [vmem:[%s5 + $0x188] sm:$0xff]
    %v1728 = vld [vmem:[%s5 + $0x190] sm:$0xff]
    %v1729 = vld [vmem:[%s5 + $0x198] sm:$0xff]
    %v1730 = vld [vmem:[%s5 + $0x1a0] sm:$0xff]
    %v1731 = vld [vmem:[%s5 + $0x1a8] sm:$0xff]
    %v1732 = vld [vmem:[%s5 + $0x1b0] sm:$0xff]
    %v1733 = vld [vmem:[%s5 + $0x1b8] sm:$0xff]
    %v1734 = vld [vmem:[%s5 + $0x1c0] sm:$0xff]
    %v1735 = vld [vmem:[%s5 + $0x1c8] sm:$0xff]
    %v1736 = vld [vmem:[%s5 + $0x1d0] sm:$0xff]
    %v1737 = vld [vmem:[%s5 + $0x1d8] sm:$0xff]
    %v1738 = vld [vmem:[%s5 + $0x1e0] sm:$0xff]
    %v1739 = vld [vmem:[%s5 + $0x1e8] sm:$0xff]
    %v1740 = vld [vmem:[%s5 + $0x1f0] sm:$0xff]
    %v1741 = vld [vmem:[%s5 + $0x1f8] sm:$0xff]
    %v1742 = vld [vmem:[%s5 + $0x200] sm:$0xff]
    %v1743 = vld [vmem:[%s5 + $0x208] sm:$0xff]
    %v1744 = vld [vmem:[%s5 + $0x210] sm:$0xff]
    %v1745 = vld [vmem:[%s5 + $0x218] sm:$0xff]
    %v1746 = vld [vmem:[%s5 + $0x220] sm:$0xff]
    %v1747 = vld [vmem:[%s5 + $0x228] sm:$0xff]
    %v1748 = vld [vmem:[%s5 + $0x230] sm:$0xff]
    %v1749 = vld [vmem:[%s5 + $0x238] sm:$0xff]
    %v1750 = vld [vmem:[%s6] sm:$0x3f]
    %v1752 = vlaneseq
    %v1753 = vshrl.u32 %v1752, 7
    %v1754 = vsub.s32 0, %v1753
    %v1755 = vrot.slane %v1750, %v1754
    %v1756 = vlaneseq
    %v1757 = vshrl.u32 %v1756, 7
    %v1758 = vsub.s32 1, %v1757
    %v1759 = vrot.slane %v1750, %v1758
    %v1760 = vlaneseq
    %v1761 = vshrl.u32 %v1760, 7
    %v1762 = vsub.s32 2, %v1761
    %v1763 = vrot.slane %v1750, %v1762
    %v1764 = vlaneseq
    %v1765 = vshrl.u32 %v1764, 7
    %v1766 = vsub.s32 3, %v1765
    %v1767 = vrot.slane %v1750, %v1766
    %v1768 = vlaneseq
    %v1769 = vshrl.u32 %v1768, 7
    %v1770 = vsub.s32 4, %v1769
    %v1771 = vrot.slane %v1750, %v1770
    %v1772 = vlaneseq
    %v1773 = vshrl.u32 %v1772, 7
    %v1774 = vsub.s32 5, %v1773
    %v1775 = vrot.slane %v1750, %v1774
    %v1854 = vunpack.c.l.b16 %v1678
    %v1855 = vunpack.c.h.b16 %v1678
    %v1856 = vunpack.c.l.b16 %v1679
    %v1857 = vunpack.c.h.b16 %v1679
    %v1858 = vunpack.c.l.b16 %v1680
    %v1859 = vunpack.c.h.b16 %v1680
    %v1860 = vunpack.c.l.b16 %v1681
    %v1861 = vunpack.c.h.b16 %v1681
    %v1862 = vunpack.c.l.b16 %v1682
    %v1863 = vunpack.c.h.b16 %v1682
    %v1864 = vunpack.c.l.b16 %v1683
    %v1865 = vunpack.c.h.b16 %v1683
    %v1866 = vunpack.c.l.b16 %v1684
    %v1867 = vunpack.c.h.b16 %v1684
    %v1868 = vunpack.c.l.b16 %v1685
    %v1869 = vunpack.c.h.b16 %v1685
    %v1870 = vunpack.c.l.b16 %v1686
    %v1871 = vunpack.c.h.b16 %v1686
    %v1872 = vunpack.c.l.b16 %v1687
    %v1873 = vunpack.c.h.b16 %v1687
    %v1874 = vunpack.c.l.b16 %v1688
    %v1875 = vunpack.c.h.b16 %v1688
    %v1876 = vunpack.c.l.b16 %v1689
    %v1877 = vunpack.c.h.b16 %v1689
    %v1878 = vunpack.c.l.b16 %v1690
    %v1879 = vunpack.c.h.b16 %v1690
    %v1880 = vunpack.c.l.b16 %v1691
    %v1881 = vunpack.c.h.b16 %v1691
    %v1882 = vunpack.c.l.b16 %v1692
    %v1883 = vunpack.c.h.b16 %v1692
    %v1884 = vunpack.c.l.b16 %v1693
    %v1885 = vunpack.c.h.b16 %v1693
    %v1886 = vunpack.c.l.b16 %v1694
    %v1887 = vunpack.c.h.b16 %v1694
    %v1888 = vunpack.c.l.b16 %v1695
    %v1889 = vunpack.c.h.b16 %v1695
    %v1890 = vunpack.c.l.b16 %v1696
    %v1891 = vunpack.c.h.b16 %v1696
    %v1892 = vunpack.c.l.b16 %v1697
    %v1893 = vunpack.c.h.b16 %v1697
    %v1894 = vunpack.c.l.b16 %v1698
    %v1895 = vunpack.c.h.b16 %v1698
    %v1896 = vunpack.c.l.b16 %v1699
    %v1897 = vunpack.c.h.b16 %v1699
    %v1898 = vunpack.c.l.b16 %v1700
    %v1899 = vunpack.c.h.b16 %v1700
    %v1900 = vunpack.c.l.b16 %v1701
    %v1901 = vunpack.c.h.b16 %v1701
    %v1902 = vunpack.c.l.b16 %v1702
    %v1903 = vunpack.c.h.b16 %v1702
    %v1904 = vunpack.c.l.b16 %v1703
    %v1905 = vunpack.c.h.b16 %v1703
    %v1906 = vunpack.c.l.b16 %v1704
    %v1907 = vunpack.c.h.b16 %v1704
    %v1908 = vunpack.c.l.b16 %v1705
    %v1909 = vunpack.c.h.b16 %v1705
    %v1910 = vunpack.c.l.b16 %v1706
    %v1911 = vunpack.c.h.b16 %v1706
    %v1912 = vunpack.c.l.b16 %v1707
    %v1913 = vunpack.c.h.b16 %v1707
    %v1914 = vunpack.c.l.b16 %v1708
    %v1915 = vunpack.c.h.b16 %v1708
    %v1916 = vunpack.c.l.b16 %v1709
    %v1917 = vunpack.c.h.b16 %v1709
    %v1918 = vunpack.c.l.b16 %v1710
    %v1919 = vunpack.c.h.b16 %v1710
    %v1920 = vunpack.c.l.b16 %v1711
    %v1921 = vunpack.c.h.b16 %v1711
    %v1922 = vunpack.c.l.b16 %v1712
    %v1923 = vunpack.c.h.b16 %v1712
    %v1924 = vunpack.c.l.b16 %v1713
    %v1925 = vunpack.c.h.b16 %v1713
    %v1926 = vunpack.c.l.b16 %v1714
    %v1927 = vunpack.c.h.b16 %v1714
    %v1928 = vunpack.c.l.b16 %v1715
    %v1929 = vunpack.c.h.b16 %v1715
    %v1930 = vunpack.c.l.b16 %v1716
    %v1931 = vunpack.c.h.b16 %v1716
    %v1932 = vunpack.c.l.b16 %v1717
    %v1933 = vunpack.c.h.b16 %v1717
    %v1934 = vunpack.c.l.b16 %v1718
    %v1935 = vunpack.c.h.b16 %v1718
    %v1936 = vunpack.c.l.b16 %v1719
    %v1937 = vunpack.c.h.b16 %v1719
    %v1938 = vunpack.c.l.b16 %v1720
    %v1939 = vunpack.c.h.b16 %v1720
    %v1940 = vunpack.c.l.b16 %v1721
    %v1941 = vunpack.c.h.b16 %v1721
    %v1942 = vunpack.c.l.b16 %v1722
    %v1943 = vunpack.c.h.b16 %v1722
    %v1944 = vunpack.c.l.b16 %v1723
    %v1945 = vunpack.c.h.b16 %v1723
    %v1946 = vunpack.c.l.b16 %v1724
    %v1947 = vunpack.c.h.b16 %v1724
    %v1948 = vunpack.c.l.b16 %v1725
    %v1949 = vunpack.c.h.b16 %v1725
    %v1950 = vunpack.c.l.b16 %v1726
    %v1951 = vunpack.c.h.b16 %v1726
    %v1952 = vunpack.c.l.b16 %v1727
    %v1953 = vunpack.c.h.b16 %v1727
    %v1954 = vunpack.c.l.b16 %v1728
    %v1955 = vunpack.c.h.b16 %v1728
    %v1956 = vunpack.c.l.b16 %v1729
    %v1957 = vunpack.c.h.b16 %v1729
    %v1958 = vunpack.c.l.b16 %v1730
    %v1959 = vunpack.c.h.b16 %v1730
    %v1960 = vunpack.c.l.b16 %v1731
    %v1961 = vunpack.c.h.b16 %v1731
    %v1962 = vunpack.c.l.b16 %v1732
    %v1963 = vunpack.c.h.b16 %v1732
    %v1964 = vunpack.c.l.b16 %v1733
    %v1965 = vunpack.c.h.b16 %v1733
    %v1966 = vunpack.c.l.b16 %v1734
    %v1967 = vunpack.c.h.b16 %v1734
    %v1968 = vunpack.c.l.b16 %v1735
    %v1969 = vunpack.c.h.b16 %v1735
    %v1970 = vunpack.c.l.b16 %v1736
    %v1971 = vunpack.c.h.b16 %v1736
    %v1972 = vunpack.c.l.b16 %v1737
    %v1973 = vunpack.c.h.b16 %v1737
    %v1974 = vunpack.c.l.b16 %v1738
    %v1975 = vunpack.c.h.b16 %v1738
    %v1976 = vunpack.c.l.b16 %v1739
    %v1977 = vunpack.c.h.b16 %v1739
    %v1978 = vunpack.c.l.b16 %v1740
    %v1979 = vunpack.c.h.b16 %v1740
    %v1980 = vunpack.c.l.b16 %v1741
    %v1981 = vunpack.c.h.b16 %v1741
    %v1982 = vunpack.c.l.b16 %v1742
    %v1983 = vunpack.c.h.b16 %v1742
    %v1984 = vunpack.c.l.b16 %v1743
    %v1985 = vunpack.c.h.b16 %v1743
    %v1986 = vunpack.c.l.b16 %v1744
    %v1987 = vunpack.c.h.b16 %v1744
    %v1988 = vunpack.c.l.b16 %v1745
    %v1989 = vunpack.c.h.b16 %v1745
    %v1990 = vunpack.c.l.b16 %v1746
    %v1991 = vunpack.c.h.b16 %v1746
    %v1992 = vunpack.c.l.b16 %v1747
    %v1993 = vunpack.c.h.b16 %v1747
    %v1994 = vunpack.c.l.b16 %v1748
    %v1995 = vunpack.c.h.b16 %v1748
    %v1996 = vunpack.c.l.b16 %v1749
    %v1997 = vunpack.c.h.b16 %v1749
    %v1998 = vpack.c.b16 %v1860, %v1854
    %v1999 = vpack.c.b16 %v1861, %v1855
    %v2000 = vpack.c.b16 %v1862, %v1856
    %v2001 = vpack.c.b16 %v1863, %v1857
    %v2002 = vpack.c.b16 %v1864, %v1858
    %v2003 = vpack.c.b16 %v1865, %v1859
    %v2004 = vpack.c.b16 %v1872, %v1866
    %v2005 = vpack.c.b16 %v1873, %v1867
    %v2006 = vpack.c.b16 %v1874, %v1868
    %v2007 = vpack.c.b16 %v1875, %v1869
    %v2008 = vpack.c.b16 %v1876, %v1870
    %v2009 = vpack.c.b16 %v1877, %v1871
    %v2010 = vpack.c.b16 %v1884, %v1878
    %v2011 = vpack.c.b16 %v1885, %v1879
    %v2012 = vpack.c.b16 %v1886, %v1880
    %v2013 = vpack.c.b16 %v1887, %v1881
    %v2014 = vpack.c.b16 %v1888, %v1882
    %v2015 = vpack.c.b16 %v1889, %v1883
    %v2016 = vpack.c.b16 %v1896, %v1890
    %v2017 = vpack.c.b16 %v1897, %v1891
    %v2018 = vpack.c.b16 %v1898, %v1892
    %v2019 = vpack.c.b16 %v1899, %v1893
    %v2020 = vpack.c.b16 %v1900, %v1894
    %v2021 = vpack.c.b16 %v1901, %v1895
    %v2022 = vpack.c.b16 %v1908, %v1902
    %v2023 = vpack.c.b16 %v1909, %v1903
    %v2024 = vpack.c.b16 %v1910, %v1904
    %v2025 = vpack.c.b16 %v1911, %v1905
    %v2026 = vpack.c.b16 %v1912, %v1906
    %v2027 = vpack.c.b16 %v1913, %v1907
    %v2028 = vpack.c.b16 %v1920, %v1914
    %v2029 = vpack.c.b16 %v1921, %v1915
    %v2030 = vpack.c.b16 %v1922, %v1916
    %v2031 = vpack.c.b16 %v1923, %v1917
    %v2032 = vpack.c.b16 %v1924, %v1918
    %v2033 = vpack.c.b16 %v1925, %v1919
    %v2034 = vpack.c.b16 %v1932, %v1926
    %v2035 = vpack.c.b16 %v1933, %v1927
    %v2036 = vpack.c.b16 %v1934, %v1928
    %v2037 = vpack.c.b16 %v1935, %v1929
    %v2038 = vpack.c.b16 %v1936, %v1930
    %v2039 = vpack.c.b16 %v1937, %v1931
    %v2040 = vpack.c.b16 %v1944, %v1938
    %v2041 = vpack.c.b16 %v1945, %v1939
    %v2042 = vpack.c.b16 %v1946, %v1940
    %v2043 = vpack.c.b16 %v1947, %v1941
    %v2044 = vpack.c.b16 %v1948, %v1942
    %v2045 = vpack.c.b16 %v1949, %v1943
    %v2046 = vpack.c.b16 %v1956, %v1950
    %v2047 = vpack.c.b16 %v1957, %v1951
    %v2048 = vpack.c.b16 %v1958, %v1952
    %v2049 = vpack.c.b16 %v1959, %v1953
    %v2050 = vpack.c.b16 %v1960, %v1954
    %v2051 = vpack.c.b16 %v1961, %v1955
    %v2052 = vpack.c.b16 %v1968, %v1962
    %v2053 = vpack.c.b16 %v1969, %v1963
    %v2054 = vpack.c.b16 %v1970, %v1964
    %v2055 = vpack.c.b16 %v1971, %v1965
    %v2056 = vpack.c.b16 %v1972, %v1966
    %v2057 = vpack.c.b16 %v1973, %v1967
    %v2058 = vpack.c.b16 %v1980, %v1974
    %v2059 = vpack.c.b16 %v1981, %v1975
    %v2060 = vpack.c.b16 %v1982, %v1976
    %v2061 = vpack.c.b16 %v1983, %v1977
    %v2062 = vpack.c.b16 %v1984, %v1978
    %v2063 = vpack.c.b16 %v1985, %v1979
    %v2064 = vpack.c.b16 %v1992, %v1986
    %v2065 = vpack.c.b16 %v1993, %v1987
    %v2066 = vpack.c.b16 %v1994, %v1988
    %v2067 = vpack.c.b16 %v1995, %v1989
    %v2068 = vpack.c.b16 %v1996, %v1990
    %v2069 = vpack.c.b16 %v1997, %v1991
    %vm2142 = vcmask 523264
    %v2144 = vsel %vm2142, %v1677, 0
    %2146 = vmatprep.subr.bf16.mxu0 %v1999
    %2147 = vmatpush1.bf16.msra.mxu0 %v1998
    %2148 = vmatprep.subr.bf16.mxu0 %v2005
    %2149 = vmatpush1.bf16.msra.mxu0 %v2004
    %2150 = vmatprep.subr.bf16.mxu0 %v2011
    %2151 = vmatpush1.bf16.msra.mxu0 %v2010
    %2152 = vmatprep.subr.bf16.mxu0 %v2017
    %2153 = vmatpush1.bf16.msra.mxu0 %v2016
    %2154 = vmatprep.subr.bf16.mxu0 %v2023
    %2155 = vmatpush1.bf16.msra.mxu0 %v2022
    %2156 = vmatprep.subr.bf16.mxu0 %v2029
    %2157 = vmatpush1.bf16.msra.mxu0 %v2028
    %2158 = vmatprep.subr.bf16.mxu0 %v2035
    %2159 = vmatpush1.bf16.msra.mxu0 %v2034
    %2160 = vmatprep.subr.bf16.mxu0 %v2041
    %2161 = vmatpush1.bf16.msra.mxu0 %v2040
    %2162 = vmatprep.subr.bf16.mxu0 %v2047
    %2163 = vmatpush1.bf16.msra.mxu0 %v2046
    %2164 = vmatprep.subr.bf16.mxu0 %v2053
    %2165 = vmatpush1.bf16.msra.mxu0 %v2052
    %2166 = vmatprep.subr.bf16.mxu0 %v2059
    %2167 = vmatpush1.bf16.msra.mxu0 %v2058
    %2168 = vmatprep.subr.bf16.mxu0 %v2065
    %2169 = vmatpush1.bf16.msra.mxu0 %v2064
    %2170 = vmatprep.subr.bf16.mxu0 0
    %2171 = vmatpush1.bf16.msra.mxu0 0
    %2172 = vmatprep.subr.bf16.mxu0 0
    %2173 = vmatpush1.bf16.msra.mxu0 0
    %2174 = vmatprep.subr.bf16.mxu0 0
    %2175 = vmatpush1.bf16.msra.mxu0 0
    %2176 = vmatprep.subr.bf16.mxu0 0
    %2177 = vmatpush1.bf16.msra.mxu0 0
    %2178 = vmatprep.mubr.bf16.mxu0 %v2144
    %2179 = vmatmul.mubr.bf16.gmra.mrb[0].mxu0 %v1676
    %v2180 = vpop.f32.mrb[0].mxu0
    %v2181 = vadd.f32 %v1755, %v2180
    %v2182 = vpop.f32.mrb[0].mxu0
    %v2183 = vadd.f32 %v1759, %v2182
    %v2184 = vpop.f32.mrb[0].mxu0
    %v2185 = vpop.f32.mrb[0].mxu0
    %2186 = vdwg.mxu0
    %2187 = vmatprep.subr.bf16.mxu0 %v2001
    %2188 = vmatpush1.bf16.msra.mxu0 %v2000
    %2189 = vmatprep.subr.bf16.mxu0 %v2007
    %2190 = vmatpush1.bf16.msra.mxu0 %v2006
    %2191 = vmatprep.subr.bf16.mxu0 %v2013
    %2192 = vmatpush1.bf16.msra.mxu0 %v2012
    %2193 = vmatprep.subr.bf16.mxu0 %v2019
    %2194 = vmatpush1.bf16.msra.mxu0 %v2018
    %2195 = vmatprep.subr.bf16.mxu0 %v2025
    %2196 = vmatpush1.bf16.msra.mxu0 %v2024
    %2197 = vmatprep.subr.bf16.mxu0 %v2031
    %2198 = vmatpush1.bf16.msra.mxu0 %v2030
    %2199 = vmatprep.subr.bf16.mxu0 %v2037
    %2200 = vmatpush1.bf16.msra.mxu0 %v2036
    %2201 = vmatprep.subr.bf16.mxu0 %v2043
    %2202 = vmatpush1.bf16.msra.mxu0 %v2042
    %2203 = vmatprep.subr.bf16.mxu0 %v2049
    %2204 = vmatpush1.bf16.msra.mxu0 %v2048
    %2205 = vmatprep.subr.bf16.mxu0 %v2055
    %2206 = vmatpush1.bf16.msra.mxu0 %v2054
    %2207 = vmatprep.subr.bf16.mxu0 %v2061
    %2208 = vmatpush1.bf16.msra.mxu0 %v2060
    %2209 = vmatprep.subr.bf16.mxu0 %v2067
    %2210 = vmatpush1.bf16.msra.mxu0 %v2066
    %2211 = vmatprep.subr.bf16.mxu0 0
    %2212 = vmatpush1.bf16.msra.mxu0 0
    %2213 = vmatprep.subr.bf16.mxu0 0
    %2214 = vmatpush1.bf16.msra.mxu0 0
    %2215 = vmatprep.subr.bf16.mxu0 0
    %2216 = vmatpush1.bf16.msra.mxu0 0
    %2217 = vmatprep.subr.bf16.mxu0 0
    %2218 = vmatpush1.bf16.msra.mxu0 0
    %2219 = vmatprep.mubr.bf16.mxu0 %v2144
    %2220 = vmatmul.mubr.bf16.gmra.mrb[0].mxu0 %v1676
    %v2221 = vpop.f32.mrb[0].mxu0
    %v2222 = vadd.f32 %v1763, %v2221
    %v2223 = vpop.f32.mrb[0].mxu0
    %v2224 = vadd.f32 %v1767, %v2223
    %v2225 = vpop.f32.mrb[0].mxu0
    %v2226 = vpop.f32.mrb[0].mxu0
    %2227 = vdwg.mxu0
    %2228 = vmatprep.subr.bf16.mxu0 %v2003
    %2229 = vmatpush1.bf16.msra.mxu0 %v2002
    %2230 = vmatprep.subr.bf16.mxu0 %v2009
    %2231 = vmatpush1.bf16.msra.mxu0 %v2008
    %2232 = vmatprep.subr.bf16.mxu0 %v2015
    %2233 = vmatpush1.bf16.msra.mxu0 %v2014
    %2234 = vmatprep.subr.bf16.mxu0 %v2021
    %2235 = vmatpush1.bf16.msra.mxu0 %v2020
    %2236 = vmatprep.subr.bf16.mxu0 %v2027
    %2237 = vmatpush1.bf16.msra.mxu0 %v2026
    %2238 = vmatprep.subr.bf16.mxu0 %v2033
    %2239 = vmatpush1.bf16.msra.mxu0 %v2032
    %2240 = vmatprep.subr.bf16.mxu0 %v2039
    %2241 = vmatpush1.bf16.msra.mxu0 %v2038
    %2242 = vmatprep.subr.bf16.mxu0 %v2045
    %2243 = vmatpush1.bf16.msra.mxu0 %v2044
    %2244 = vmatprep.subr.bf16.mxu0 %v2051
    %2245 = vmatpush1.bf16.msra.mxu0 %v2050
    %2246 = vmatprep.subr.bf16.mxu0 %v2057
    %2247 = vmatpush1.bf16.msra.mxu0 %v2056
    %2248 = vmatprep.subr.bf16.mxu0 %v2063
    %2249 = vmatpush1.bf16.msra.mxu0 %v2062
    %2250 = vmatprep.subr.bf16.mxu0 %v2069
    %2251 = vmatpush1.bf16.msra.mxu0 %v2068
    %2252 = vmatprep.subr.bf16.mxu0 0
    %2253 = vmatpush1.bf16.msra.mxu0 0
    %2254 = vmatprep.subr.bf16.mxu0 0
    %2255 = vmatpush1.bf16.msra.mxu0 0
    %2256 = vmatprep.subr.bf16.mxu0 0
    %2257 = vmatpush1.bf16.msra.mxu0 0
    %2258 = vmatprep.subr.bf16.mxu0 0
    %2259 = vmatpush1.bf16.msra.mxu0 0
    %2260 = vmatprep.mubr.bf16.mxu0 %v2144
    %2261 = vmatmul.mubr.bf16.gmra.mrb[0].mxu0 %v1676
    %v2262 = vpop.f32.mrb[0].mxu0
    %v2263 = vadd.f32 %v1771, %v2262
    %v2264 = vpop.f32.mrb[0].mxu0
    %v2265 = vadd.f32 %v1775, %v2264
    %v2266 = vpop.f32.mrb[0].mxu0
    %v2267 = vpop.f32.mrb[0].mxu0
    %2268 = vdwg.mxu0
    %2269 = vst [vmem:[#allocation5] sm:$0xff] %v2181
    %2270 = vst [vmem:[#allocation5 + $0x8] sm:$0xff] %v2183
    %2271 = vst [vmem:[#allocation5 + $0x10] sm:$0xff] %v2222
    %2272 = vst [vmem:[#allocation5 + $0x18] sm:$0xff] %v2224
    %2273 = vst [vmem:[#allocation5 + $0x20] sm:$0xff] %v2263
    %2274 = vst [vmem:[#allocation5 + $0x28] sm:$0xff] %v2265
    // Predicated region
    $region34: #{tpu_custom_call.1} parent=1 // pred_check
      _
    $region35: #{tpu_custom_call.1} parent=1 // pred_check_branch
      %2276 = sbr.rel (0) target = $region37
    $region36: #{tpu_custom_call.1} parent=1 // pred_region
      %s2278 = ssub.s32 768, 768
      %2279 = vsyncadd [#allocation4], %s2278
      %s2281 = sshll.u32 [#allocation5], 4
      %s2282 = int_to_ptr.vmem [resolvable:$true] %s2281
      %2284 = dma.vmem_to_hbm [thread:$0]  %s2282, 768, %s7, [#allocation4]
    $region37: #{tpu_custom_call.1} parent=1 // pred_fallthru
      _
    // Predicated region
    $region38: #{tpu_custom_call.1} parent=1 // pred_check
      _
    $region39: #{tpu_custom_call.1} parent=1 // pred_check_branch
      %2286 = sbr.rel (0) target = $region41
    $region40: #{tpu_custom_call.1} parent=1 // pred_region
      %2287 = dma.done [#allocation4], 768
    $region41: #{tpu_custom_call.1} parent=1 // pred_fallthru
      _
    %2288 = vsyncpa [#allocation3], 1
    %2289 = vsyncpa [#allocation4], 1

</llo_original>
